<compile_context>
chip_gen: v7x
topology: tpu7x:2x2x1
jax: 0.10.0
libtpu: 0.0.40
codegen_flags: <defaults>
</compile_context>

<pallas_src>
import math
import numpy as np
import jax
import jax.numpy as jnp
from jax.experimental import pallas as pl
from jax.experimental.pallas import tpu as pltpu

# ---- synthetic "config" (small shapes consistent with the module) ----
V = 256   # config.bow_vocab_size  (input_dim)
H = 128   # hidden_dim of the NTM encoder
K = 32    # config.topic_num
R = 64    # speaker_rep_dim (= config.hidden_dim * 2, bidirectional)
S = 2     # config.speaker_num


def _convntm_kernel(x_ref, reps_ref, seg_ref, segt_ref,
                    w1s, b11, w12, b12,
                    we, wr, ba, bphi,
                    wagg, bmulv,
                    wg2l_p, wg2l_t, bg2l,
                    wg, bg, wd1,
                    bow_ref, rec_ref, mulv_ref):
    f32 = jnp.float32
    bf16 = jnp.bfloat16
    hid = w12.shape[0]          # H
    k_top = bphi.shape[1]       # K

    def mm(a, w_ref):
        # MXU matmul: bf16 operands (weights stored bf16), f32 accumulation.
        return jnp.dot(a.astype(bf16), w_ref[...], preferred_element_type=f32)

    x = x_ref[...]              # (M, V)  f32
    reps = reps_ref[...]        # (M, R)  f32

    # F.normalize(x, p=1, dim=-1)  (eps = 1e-12); exact divide (bow is a
    # downstream loss target, keep it accurate).
    denom = jnp.maximum(jnp.sum(jnp.abs(x), axis=-1, keepdims=True), 1e-12)
    xn = x / denom
    bow_ref[...] = xn           # store early: shortens xn's live range

    # encode(): fused [fc11 | fcs] matmul over xn -> (M, 2H)
    x2h = mm(xn, w1s)
    e1 = jnp.maximum(x2h[:, :hid] + b11[...], 0.0)
    e1 = jnp.maximum(mm(e1, w12) + b12[...], 0.0)
    e1 = e1 + x2h[:, hid:]

    # fused gate + phi projections over e1 / reps -> (M, 2H+K)
    mixed = mm(e1, we) + mm(reps, wr)
    pre = mixed[:, :2 * hid] + ba[...]
    e3 = jax.nn.sigmoid(pre[:, :hid]) * jnp.tanh(pre[:, hid:])
    phi_row = mixed[:, 2 * hid:] + bphi[...]        # per-row part of phi  (M, K)

    # masked per-speaker aggregation: seg already folds the nvalid mask and
    # the block-diagonal speaker selection; f32 matmul (small) keeps
    # mu/logvar close to the f32 reference.
    agg = jnp.tanh(jnp.dot(seg_ref[...], e3, preferred_element_type=f32))   # (B, H)

    # fused agg head: [phi(:, agg-part) | fc21 | fc22]
    head = mm(agg, wagg)                            # (B, 3K)
    phi_a = head[:, :k_top]
    mulv = head[:, k_top:] + bmulv[...]             # (B, 2K) = [mu | logvar]
    mulv_ref[...] = mulv
    mu = mulv[:, :k_top]
    # TODO(synk): reparameterize() adds eps*std noise in training mode; eval mode uses z = mu.
    theta_b = mm(mu, wg2l_t)                        # (B, K)

    # single MXU broadcast of the per-speaker quantities back to rows
    sp_rows = jnp.dot(segt_ref[...],
                      jnp.concatenate([phi_a, theta_b], axis=-1),
                      preferred_element_type=f32)   # (M, 2K)

    # phi = Linear([agg, reps, e1]);  z = tanh(global_to_local([phi, theta]))
    phi = phi_row + sp_rows[:, :k_top]
    zl = jnp.tanh(mm(phi, wg2l_p) + sp_rows[:, k_top:] + bg2l[...])

    # generate(): 4 tanh layers (stacked weights) + residual
    g = zl
    for i in range(4):
        g = jnp.tanh(jnp.dot(g.astype(bf16), wg[i],
                             preferred_element_type=f32) + bg[i])
    g = g + zl

    # decode(): softmax over vocab (denominator reciprocal on the EUP)
    logits = mm(g, wd1)                             # (M, V)
    logits = logits - jnp.max(logits, axis=-1, keepdims=True)
    ex = jnp.exp(logits)
    rec_ref[...] = ex * pl.reciprocal(jnp.sum(ex, axis=-1, keepdims=True), approx=True)


def _choose_b_blk(n_sp, t_len, target_m=512):
    """Speaker-batches per grid step.

    Small problems run as a single block whose dims equal the full array dims
    (no (8,128) alignment constraint, no padding).  Bigger batches use
    8-aligned blocks of ~target_m rows; that automatically yields >=2 grid
    steps so both v7x TensorCores get work, while keeping M large enough to
    amortise the ~0.35us per-step overhead on all generations."""
    if n_sp * t_len <= target_m:
        return n_sp
    b = max(8, (target_m // max(t_len, 1)) // 8 * 8)
    if b >= n_sp:
        return n_sp
    g = -(-n_sp // b)
    return -(-(-(-n_sp // g)) // 8) * 8      # balance blocks, keep 8-aligned


def convntm_pallas(nvalid, sp_bow, sp_reps, weights, target_m=512):
    n_sp, t_len, v_dim = sp_bow.shape
    r_dim = sp_reps.shape[-1]
    b_blk = _choose_b_blk(n_sp, t_len, target_m)
    grid_n = -(-n_sp // b_blk)
    n_pad = grid_n * b_blk
    rows_blk = b_blk * t_len

    if n_pad != n_sp:
        pad = n_pad - n_sp
        sp_bow = jnp.pad(sp_bow, ((0, pad), (0, 0), (0, 0)))
        sp_reps = jnp.pad(sp_reps, ((0, pad), (0, 0), (0, 0)))
        nvalid = jnp.pad(nvalid, (0, pad))

    # host-side glue (cheap one-time XLA ops): flatten to (rows, feature) and
    # build the selection matrices (validity mask folded into seg).
    x_flat = sp_bow.reshape(n_pad * t_len, v_dim)
    r_flat = sp_reps.reshape(n_pad * t_len, r_dim)

    r_idx = jnp.arange(rows_blk)
    local_b = jnp.arange(n_pad) % b_blk
    # seg[s, r] = 1 iff row r of speaker s's block belongs to s and is a valid utterance
    seg = ((r_idx[None, :] // t_len == local_b[:, None]) &
           ((r_idx[None, :] % t_len) < nvalid[:, None])).astype(jnp.float32)
    # segt[r, b] = 1 iff row r belongs to local speaker b (constant across blocks)
    segt = (r_idx[:, None] // t_len ==
            jnp.arange(b_blk)[None, :]).astype(jnp.float32)

    data_specs = [
        pl.BlockSpec((rows_blk, v_dim), lambda g: (g, 0)),
        pl.BlockSpec((rows_blk, r_dim), lambda g: (g, 0)),
        pl.BlockSpec((b_blk, rows_blk), lambda g: (g, 0)),
        pl.BlockSpec((rows_blk, b_blk), lambda g: (0, 0)),   # constant: fetched once
    ]
    # Weights/biases: full-array blocks with constant index_map -> fetched once.
    w_specs = [pl.BlockSpec(w.shape, lambda g, nd=w.ndim: (0,) * nd) for w in weights]
    out_specs = [
        pl.BlockSpec((rows_blk, v_dim), lambda g: (g, 0)),
        pl.BlockSpec((rows_blk, v_dim), lambda g: (g, 0)),
        pl.BlockSpec((b_blk, 2 * K), lambda g: (g, 0)),      # speaker-granularity mu|logvar
    ]
    out_shape = (
        jax.ShapeDtypeStruct((n_pad * t_len, v_dim), jnp.float32),
        jax.ShapeDtypeStruct((n_pad * t_len, v_dim), jnp.float32),
        jax.ShapeDtypeStruct((n_pad, 2 * K), jnp.float32),
    )

    fn = pl.pallas_call(
        _convntm_kernel,
        out_shape=out_shape,
        grid_spec=pltpu.PrefetchScalarGridSpec(
            num_scalar_prefetch=0,
            grid=(grid_n,),
            in_specs=data_specs + w_specs,
            out_specs=out_specs),
        compiler_params=pltpu.CompilerParams(
            dimension_semantics=("parallel",),
            vmem_limit_bytes=32 * 1024 * 1024),
    )
    bow_f, rec_f, mulv_sp = fn(x_flat, r_flat, seg, segt, *weights)

    bow = bow_f.reshape(n_pad, t_len, v_dim)[:n_sp]
    rec = rec_f.reshape(n_pad, t_len, v_dim)[:n_sp]
    mulv = mulv_sp[:n_sp]
    return bow, rec, mulv[:, :K], mulv[:, K:]


def init_params(key):
    keys = jax.random.split(key, 32)
    ki = iter(keys)

    def lin(fan_in, fan_out, bias=True):
        bound = 1.0 / float(np.sqrt(fan_in))
        w = jax.random.uniform(next(ki), (fan_in, fan_out), jnp.float32, -bound, bound)
        b = (jax.random.uniform(next(ki), (1, fan_out), jnp.float32, -bound, bound)
             if bias else None)
        return w, b

    w11, b11 = lin(V, H)
    w12, b12 = lin(H, H)
    w21, b21 = lin(H, K)
    w22, b22 = lin(H, K)
    ws, _ = lin(V, H, bias=False)
    wa1, ba1 = lin(H + R, H)        # input order: [reps(R), e1(H)]
    wa2, ba2 = lin(H + R, H)
    wphi, bphi = lin(H + R + H, K)  # input order: [agg(H), reps(R), e1(H)]
    wg2l, bg2l = lin(2 * K, K)      # input order: [phi(K), theta(K)]
    wg1, bg1 = lin(K, K)
    wg2, bg2 = lin(K, K)
    wg3, bg3 = lin(K, K)
    wg4, bg4 = lin(K, K)
    wd1, _ = lin(K, V, bias=False)
    # rho / alphas layers of the torch module are unused in forward()

    full = dict(w11=w11, b11=b11, w12=w12, b12=b12, ws=ws,
                wa1=wa1, ba1=ba1, wa2=wa2, ba2=ba2,
                wphi=wphi, bphi=bphi,
                w21=w21, b21=b21, w22=w22, b22=b22,
                wg2l=wg2l, bg2l=bg2l,
                wg1=wg1, bg1=bg1, wg2=wg2, bg2=bg2,
                wg3=wg3, bg3=bg3, wg4=wg4, bg4=bg4, wd1=wd1)

    bf = lambda w: w.astype(jnp.bfloat16)
    packed = [
        bf(jnp.concatenate([w11, ws], axis=1)),                         # w1s (V, 2H)
        b11, bf(w12), b12,
        bf(jnp.concatenate([wa1[R:], wa2[R:], wphi[H + R:]], axis=1)),  # we  (H, 2H+K)
        bf(jnp.concatenate([wa1[:R], wa2[:R], wphi[H:H + R]], axis=1)), # wr  (R, 2H+K)
        jnp.concatenate([ba1, ba2], axis=1),                            # ba  (1, 2H)
        bphi,                                                           # (1, K)
        bf(jnp.concatenate([wphi[:H], w21, w22], axis=1)),              # wagg (H, 3K)
        jnp.concatenate([b21, b22], axis=1),                            # bmulv (1, 2K)
        bf(wg2l[:K]), bf(wg2l[K:]), bg2l,                               # wg2l_p, wg2l_t, bg2l
        bf(jnp.stack([wg1, wg2, wg3, wg4], axis=0)),                    # wg (4, K, K)
        jnp.stack([bg1, bg2, bg3, bg4], axis=0),                        # bg (4, 1, K)
        bf(wd1),                                                        # wd1 (K, V)
    ]
    return full, packed


def ref_forward(nvalid, x, reps, p):
    """Pure-JAX f32 reference mirroring the torch forward (eval mode)."""
    Bp, T, _ = x.shape
    xn = x / jnp.maximum(jnp.sum(jnp.abs(x), -1, keepdims=True), 1e-12)
    e1 = jax.nn.relu(xn @ p['w11'] + p['b11'])
    e1 = jax.nn.relu(e1 @ p['w12'] + p['b12'])
    e1 = e1 + xn @ p['ws']
    e2 = jnp.concatenate([reps, e1], -1)
    e3 = jax.nn.sigmoid(e2 @ p['wa1'] + p['ba1']) * jnp.tanh(e2 @ p['wa2'] + p['ba2'])
    mask = (jnp.arange(T)[None, :, None] < nvalid[:, None, None]).astype(e3.dtype)
    e3 = e3 * mask
    agg = jnp.tanh(e3.sum(axis=1))
    phi_in = jnp.concatenate([jnp.broadcast_to(agg[:, None, :], (Bp, T, H)), e2], -1)
    phi = phi_in @ p['wphi'] + p['bphi']
    mu = agg @ p['w21'] + p['b21']
    lv = agg @ p['w22'] + p['b22']
    theta = jnp.broadcast_to(mu[:, None, :], (Bp, T, K))
    zl = jnp.tanh(jnp.concatenate([phi, theta], -1) @ p['wg2l'] + p['bg2l'])
    g = jnp.tanh(zl @ p['wg1'] + p['bg1'])
    g = jnp.tanh(g @ p['wg2'] + p['bg2'])
    g = jnp.tanh(g @ p['wg3'] + p['bg3'])
    g = jnp.tanh(g @ p['wg4'] + p['bg4'])
    g = g + zl
    rec = jax.nn.softmax(g @ p['wd1'], axis=-1)
    return xn, rec, mu, lv


if __name__ == "__main__":
    key = jax.random.PRNGKey(0)
    k_bow, k_reps, k_params = jax.random.split(key, 3)

    bs = 4
    lens = [8, 6, 7, 5]                 # utterances per dialogue
    max_len = max(lens)

    uttr_bow = jax.random.uniform(k_bow, (bs, max_len, V), jnp.float32)   # non-negative bow
    uttr_reps = jax.random.normal(k_reps, (bs, max_len, R), jnp.float32)

    # --- glue: speaker-interleaved re-packing (matches the torch python loops) ---
    speaker_idx = [[np.arange(i, l, S) for i in range(S)] for l in lens]                 # [b][i]
    speaker_uttr_num = [[len(speaker_idx[b][i]) for b in range(bs)] for i in range(S)]   # [i][b]
    T = max(max(speaker_uttr_num[i]) for i in range(S))

    sp_bow = jnp.zeros((bs * S, T, V), jnp.float32)
    sp_reps = jnp.zeros((bs * S, T, R), jnp.float32)
    for i in range(S):
        for b in range(bs):
            idx = speaker_idx[b][i]
            n = len(idx)
            sp_bow = sp_bow.at[bs * i + b, :n, :].set(uttr_bow[b, idx, :])
            sp_reps = sp_reps.at[bs * i + b, :n, :].set(uttr_reps[b, idx, :])

    nvalid = jnp.array([speaker_uttr_num[i][b] for i in range(S) for b in range(bs)],
                       dtype=jnp.int32)

    params_full, params_packed = init_params(k_params)

    bow_all, rec_all, mu, logvar = convntm_pallas(nvalid, sp_bow, sp_reps, params_packed)

    # gather valid rows (x_bow / x_rec concat order of the torch forward)
    x_bow_parts, x_rec_parts = [], []
    for i in range(S):
        for b in range(bs):
            n = speaker_uttr_num[i][b]
            x_bow_parts.append(bow_all[bs * i + b, :n, :])
            x_rec_parts.append(rec_all[bs * i + b, :n, :])
    x_bow = jnp.concatenate(x_bow_parts, axis=0)
    x_rec = jnp.concatenate(x_rec_parts, axis=0)

    jax.block_until_ready((x_bow, x_rec, mu, logvar))

    # correctness check against a pure-JAX f32 reference
    # (tolerance covers bf16 MXU operands with f32 accumulation + approx softmax reciprocal)
    r_bow, r_rec, r_mu, r_lv = ref_forward(nvalid, sp_bow, sp_reps, params_full)
    np.testing.assert_allclose(np.asarray(bow_all), np.asarray(r_bow), atol=2e-2, rtol=2e-2)
    np.testing.assert_allclose(np.asarray(rec_all), np.asarray(r_rec), atol=2e-2, rtol=2e-2)
    np.testing.assert_allclose(np.asarray(mu), np.asarray(r_mu), atol=2e-2, rtol=2e-2)
    np.testing.assert_allclose(np.asarray(logvar), np.asarray(r_lv), atol=2e-2, rtol=2e-2)

    print("KERNEL_OK")
</pallas_src>

<mosaic_0001>
module attributes {stable_mosaic.version = 11 : i64} {
  func.func @_convntm_kernel(%arg0: i32, %arg1: memref<32x256xf32, #tpu.memory_space<vmem>>, %arg2: memref<32x64xf32, #tpu.memory_space<vmem>>, %arg3: memref<8x32xf32, #tpu.memory_space<vmem>>, %arg4: memref<32x8xf32, #tpu.memory_space<vmem>>, %arg5: memref<256x256xbf16, #tpu.memory_space<vmem>>, %arg6: memref<1x128xf32, #tpu.memory_space<vmem>>, %arg7: memref<128x128xbf16, #tpu.memory_space<vmem>>, %arg8: memref<1x128xf32, #tpu.memory_space<vmem>>, %arg9: memref<128x288xbf16, #tpu.memory_space<vmem>>, %arg10: memref<64x288xbf16, #tpu.memory_space<vmem>>, %arg11: memref<1x256xf32, #tpu.memory_space<vmem>>, %arg12: memref<1x32xf32, #tpu.memory_space<vmem>>, %arg13: memref<128x96xbf16, #tpu.memory_space<vmem>>, %arg14: memref<1x64xf32, #tpu.memory_space<vmem>>, %arg15: memref<32x32xbf16, #tpu.memory_space<vmem>>, %arg16: memref<32x32xbf16, #tpu.memory_space<vmem>>, %arg17: memref<1x32xf32, #tpu.memory_space<vmem>>, %arg18: memref<4x32x32xbf16, #tpu.memory_space<vmem>>, %arg19: memref<4x1x32xf32, #tpu.memory_space<vmem>>, %arg20: memref<32x256xbf16, #tpu.memory_space<vmem>>, %arg21: memref<32x256xf32, #tpu.memory_space<vmem>>, %arg22: memref<32x256xf32, #tpu.memory_space<vmem>>, %arg23: memref<8x64xf32, #tpu.memory_space<vmem>>) attributes {dimension_semantics = [#tpu.dimension_semantics<parallel>], iteration_bounds = array<i64: 1>, scalar_prefetch = 0 : i64, scratch_operands = 0 : i64, tpu.core_type = #tpu.core_type<tc>, window_params = [{transform_indices = @transform_0, window_bounds = array<i64: 32, 256>}, {transform_indices = @transform_1, window_bounds = array<i64: 32, 64>}, {transform_indices = @transform_2, window_bounds = array<i64: 8, 32>}, {pipeline_mode = #tpu.pipeline_mode<synchronous>, transform_indices = @transform_3, window_bounds = array<i64: 32, 8>}, {pipeline_mode = #tpu.pipeline_mode<synchronous>, transform_indices = @transform_4, window_bounds = array<i64: 256, 256>}, {pipeline_mode = #tpu.pipeline_mode<synchronous>, transform_indices = @transform_5, window_bounds = array<i64: 1, 128>}, {pipeline_mode = #tpu.pipeline_mode<synchronous>, transform_indices = @transform_6, window_bounds = array<i64: 128, 128>}, {pipeline_mode = #tpu.pipeline_mode<synchronous>, transform_indices = @transform_7, window_bounds = array<i64: 1, 128>}, {pipeline_mode = #tpu.pipeline_mode<synchronous>, transform_indices = @transform_8, window_bounds = array<i64: 128, 288>}, {pipeline_mode = #tpu.pipeline_mode<synchronous>, transform_indices = @transform_9, window_bounds = array<i64: 64, 288>}, {pipeline_mode = #tpu.pipeline_mode<synchronous>, transform_indices = @transform_10, window_bounds = array<i64: 1, 256>}, {pipeline_mode = #tpu.pipeline_mode<synchronous>, transform_indices = @transform_11, window_bounds = array<i64: 1, 32>}, {pipeline_mode = #tpu.pipeline_mode<synchronous>, transform_indices = @transform_12, window_bounds = array<i64: 128, 96>}, {pipeline_mode = #tpu.pipeline_mode<synchronous>, transform_indices = @transform_13, window_bounds = array<i64: 1, 64>}, {pipeline_mode = #tpu.pipeline_mode<synchronous>, transform_indices = @transform_14, window_bounds = array<i64: 32, 32>}, {pipeline_mode = #tpu.pipeline_mode<synchronous>, transform_indices = @transform_15, window_bounds = array<i64: 32, 32>}, {pipeline_mode = #tpu.pipeline_mode<synchronous>, transform_indices = @transform_16, window_bounds = array<i64: 1, 32>}, {pipeline_mode = #tpu.pipeline_mode<synchronous>, transform_indices = @transform_17, window_bounds = array<i64: 4, 32, 32>}, {pipeline_mode = #tpu.pipeline_mode<synchronous>, transform_indices = @transform_18, window_bounds = array<i64: 4, 1, 32>}, {pipeline_mode = #tpu.pipeline_mode<synchronous>, transform_indices = @transform_19, window_bounds = array<i64: 32, 256>}, {transform_indices = @transform_20, window_bounds = array<i64: 32, 256>}, {transform_indices = @transform_21, window_bounds = array<i64: 32, 256>}, {transform_indices = @transform_22, window_bounds = array<i64: 8, 64>}]} {
    %c0 = arith.constant 0 : index
    %c0_0 = arith.constant 0 : index
    %0 = vector.load %arg1[%c0, %c0_0] : memref<32x256xf32, #tpu.memory_space<vmem>>, vector<32x256xf32>
    %c0_1 = arith.constant 0 : index
    %c0_2 = arith.constant 0 : index
    %1 = vector.load %arg2[%c0_1, %c0_2] : memref<32x64xf32, #tpu.memory_space<vmem>>, vector<32x64xf32>
    %2 = math.absf %0 : vector<32x256xf32>
    %cst = arith.constant dense<0.000000e+00> : vector<32xf32>
    %3 = vector.multi_reduction <add>, %2, %cst [1] : vector<32x256xf32> to vector<32xf32>
    %4 = vector.shape_cast %3 : vector<32xf32> to vector<32x1xf32>
    %cst_3 = arith.constant 9.99999996E-13 : f32
    %5 = vector.broadcast %cst_3 : f32 to vector<32x1xf32>
    %6 = arith.maximumf %4, %5 : vector<32x1xf32>
    %7 = vector.broadcast %6 : vector<32x1xf32> to vector<32x256xf32>
    %8 = arith.divf %0, %7 : vector<32x256xf32>
    %c0_4 = arith.constant 0 : index
    %c0_5 = arith.constant 0 : index
    %9 = vector.load %arg21[%c0_4, %c0_5] : memref<32x256xf32, #tpu.memory_space<vmem>>, vector<32x256xf32>
    tpu.vector_store %arg21[%c0_4, %c0_5], %8 {strides = array<i32>} : memref<32x256xf32, #tpu.memory_space<vmem>>, vector<32x256xf32>,
    %10 = arith.truncf %8 : vector<32x256xf32> to vector<32x256xbf16>
    %c0_6 = arith.constant 0 : index
    %c0_7 = arith.constant 0 : index
    %11 = vector.load %arg5[%c0_6, %c0_7] : memref<256x256xbf16, #tpu.memory_space<vmem>>, vector<256x256xbf16>
    %cst_8 = arith.constant dense<0.000000e+00> : vector<32x256xf32>
    %12 = tpu.matmul %10, %11, %cst_8 {dimension_numbers = #tpu.dot_dimension_numbers<[1], [0], [0], [1], [0, 0, 1, 1], [], []>} : vector<32x256xbf16>, vector<256x256xbf16>, vector<32x256xf32> -> vector<32x256xf32>
    %13 = vector.extract_strided_slice %12 {offsets = [0, 0], sizes = [32, 128], strides = [1, 1]} : vector<32x256xf32> to vector<32x128xf32>
    %c0_9 = arith.constant 0 : index
    %c0_10 = arith.constant 0 : index
    %14 = vector.load %arg6[%c0_9, %c0_10] : memref<1x128xf32, #tpu.memory_space<vmem>>, vector<1x128xf32>
    %15 = vector.broadcast %14 : vector<1x128xf32> to vector<32x128xf32>
    %16 = arith.addf %13, %15 : vector<32x128xf32>
    %cst_11 = arith.constant 0.000000e+00 : f32
    %17 = vector.broadcast %cst_11 : f32 to vector<32x128xf32>
    %18 = arith.maximumf %16, %17 : vector<32x128xf32>
    %19 = arith.truncf %18 : vector<32x128xf32> to vector<32x128xbf16>
    %c0_12 = arith.constant 0 : index
    %c0_13 = arith.constant 0 : index
    %20 = vector.load %arg7[%c0_12, %c0_13] : memref<128x128xbf16, #tpu.memory_space<vmem>>, vector<128x128xbf16>
    %cst_14 = arith.constant dense<0.000000e+00> : vector<32x128xf32>
    %21 = tpu.matmul %19, %20, %cst_14 {dimension_numbers = #tpu.dot_dimension_numbers<[1], [0], [0], [1], [0, 0, 1, 1], [], []>} : vector<32x128xbf16>, vector<128x128xbf16>, vector<32x128xf32> -> vector<32x128xf32>
    %c0_15 = arith.constant 0 : index
    %c0_16 = arith.constant 0 : index
    %22 = vector.load %arg8[%c0_15, %c0_16] : memref<1x128xf32, #tpu.memory_space<vmem>>, vector<1x128xf32>
    %23 = vector.broadcast %22 : vector<1x128xf32> to vector<32x128xf32>
    %24 = arith.addf %21, %23 : vector<32x128xf32>
    %cst_17 = arith.constant 0.000000e+00 : f32
    %25 = vector.broadcast %cst_17 : f32 to vector<32x128xf32>
    %26 = arith.maximumf %24, %25 : vector<32x128xf32>
    %27 = vector.extract_strided_slice %12 {offsets = [0, 128], sizes = [32, 128], strides = [1, 1]} : vector<32x256xf32> to vector<32x128xf32>
    %28 = arith.addf %26, %27 : vector<32x128xf32>
    %29 = arith.truncf %28 : vector<32x128xf32> to vector<32x128xbf16>
    %c0_18 = arith.constant 0 : index
    %c0_19 = arith.constant 0 : index
    %30 = vector.load %arg9[%c0_18, %c0_19] : memref<128x288xbf16, #tpu.memory_space<vmem>>, vector<128x288xbf16>
    %cst_20 = arith.constant dense<0.000000e+00> : vector<32x288xf32>
    %31 = tpu.matmul %29, %30, %cst_20 {dimension_numbers = #tpu.dot_dimension_numbers<[1], [0], [0], [1], [0, 0, 1, 1], [], []>} : vector<32x128xbf16>, vector<128x288xbf16>, vector<32x288xf32> -> vector<32x288xf32>
    %32 = arith.truncf %1 : vector<32x64xf32> to vector<32x64xbf16>
    %c0_21 = arith.constant 0 : index
    %c0_22 = arith.constant 0 : index
    %33 = vector.load %arg10[%c0_21, %c0_22] : memref<64x288xbf16, #tpu.memory_space<vmem>>, vector<64x288xbf16>
    %cst_23 = arith.constant dense<0.000000e+00> : vector<32x288xf32>
    %34 = tpu.matmul %32, %33, %cst_23 {dimension_numbers = #tpu.dot_dimension_numbers<[1], [0], [0], [1], [0, 0, 1, 1], [], []>} : vector<32x64xbf16>, vector<64x288xbf16>, vector<32x288xf32> -> vector<32x288xf32>
    %35 = arith.addf %31, %34 : vector<32x288xf32>
    %36 = vector.extract_strided_slice %35 {offsets = [0, 0], sizes = [32, 256], strides = [1, 1]} : vector<32x288xf32> to vector<32x256xf32>
    %c0_24 = arith.constant 0 : index
    %c0_25 = arith.constant 0 : index
    %37 = vector.load %arg11[%c0_24, %c0_25] : memref<1x256xf32, #tpu.memory_space<vmem>>, vector<1x256xf32>
    %38 = vector.broadcast %37 : vector<1x256xf32> to vector<32x256xf32>
    %39 = arith.addf %36, %38 : vector<32x256xf32>
    %40 = vector.extract_strided_slice %39 {offsets = [0, 0], sizes = [32, 128], strides = [1, 1]} : vector<32x256xf32> to vector<32x128xf32>
    %41 = arith.negf %40 : vector<32x128xf32>
    %42 = math.exp %41 : vector<32x128xf32>
    %cst_26 = arith.constant 1.000000e+00 : f32
    %43 = vector.broadcast %cst_26 : f32 to vector<32x128xf32>
    %44 = arith.addf %43, %42 : vector<32x128xf32>
    %45 = arith.divf %43, %44 : vector<32x128xf32>
    %46 = vector.extract_strided_slice %39 {offsets = [0, 128], sizes = [32, 128], strides = [1, 1]} : vector<32x256xf32> to vector<32x128xf32>
    %47 = math.tanh %46 : vector<32x128xf32>
    %48 = arith.mulf %45, %47 : vector<32x128xf32>
    %49 = vector.extract_strided_slice %35 {offsets = [0, 256], sizes = [32, 32], strides = [1, 1]} : vector<32x288xf32> to vector<32x32xf32>
    %c0_27 = arith.constant 0 : index
    %c0_28 = arith.constant 0 : index
    %50 = vector.load %arg12[%c0_27, %c0_28] : memref<1x32xf32, #tpu.memory_space<vmem>>, vector<1x32xf32>
    %51 = vector.broadcast %50 : vector<1x32xf32> to vector<32x32xf32>
    %52 = arith.addf %49, %51 : vector<32x32xf32>
    %c0_29 = arith.constant 0 : index
    %c0_30 = arith.constant 0 : index
    %53 = vector.load %arg3[%c0_29, %c0_30] : memref<8x32xf32, #tpu.memory_space<vmem>>, vector<8x32xf32>
    %cst_31 = arith.constant dense<0.000000e+00> : vector<8x128xf32>
    %54 = tpu.matmul %53, %48, %cst_31 {dimension_numbers = #tpu.dot_dimension_numbers<[1], [0], [0], [1], [0, 0, 1, 1], [], []>} : vector<8x32xf32>, vector<32x128xf32>, vector<8x128xf32> -> vector<8x128xf32>
    %55 = math.tanh %54 : vector<8x128xf32>
    %56 = arith.truncf %55 : vector<8x128xf32> to vector<8x128xbf16>
    %c0_32 = arith.constant 0 : index
    %c0_33 = arith.constant 0 : index
    %57 = vector.load %arg13[%c0_32, %c0_33] : memref<128x96xbf16, #tpu.memory_space<vmem>>, vector<128x96xbf16>
    %cst_34 = arith.constant dense<0.000000e+00> : vector<8x96xf32>
    %58 = tpu.matmul %56, %57, %cst_34 {dimension_numbers = #tpu.dot_dimension_numbers<[1], [0], [0], [1], [0, 0, 1, 1], [], []>} : vector<8x128xbf16>, vector<128x96xbf16>, vector<8x96xf32> -> vector<8x96xf32>
    %59 = vector.extract_strided_slice %58 {offsets = [0, 0], sizes = [8, 32], strides = [1, 1]} : vector<8x96xf32> to vector<8x32xf32>
    %60 = vector.extract_strided_slice %58 {offsets = [0, 32], sizes = [8, 64], strides = [1, 1]} : vector<8x96xf32> to vector<8x64xf32>
    %c0_35 = arith.constant 0 : index
    %c0_36 = arith.constant 0 : index
    %61 = vector.load %arg14[%c0_35, %c0_36] : memref<1x64xf32, #tpu.memory_space<vmem>>, vector<1x64xf32>
    %62 = vector.broadcast %61 : vector<1x64xf32> to vector<8x64xf32>
    %63 = arith.addf %60, %62 : vector<8x64xf32>
    %c0_37 = arith.constant 0 : index
    %c0_38 = arith.constant 0 : index
    %64 = vector.load %arg23[%c0_37, %c0_38] : memref<8x64xf32, #tpu.memory_space<vmem>>, vector<8x64xf32>
    tpu.vector_store %arg23[%c0_37, %c0_38], %63 {strides = array<i32>} : memref<8x64xf32, #tpu.memory_space<vmem>>, vector<8x64xf32>,
    %65 = vector.extract_strided_slice %63 {offsets = [0, 0], sizes = [8, 32], strides = [1, 1]} : vector<8x64xf32> to vector<8x32xf32>
    %66 = arith.truncf %65 : vector<8x32xf32> to vector<8x32xbf16>
    %c0_39 = arith.constant 0 : index
    %c0_40 = arith.constant 0 : index
    %67 = vector.load %arg16[%c0_39, %c0_40] : memref<32x32xbf16, #tpu.memory_space<vmem>>, vector<32x32xbf16>
    %cst_41 = arith.constant dense<0.000000e+00> : vector<8x32xf32>
    %68 = tpu.matmul %66, %67, %cst_41 {dimension_numbers = #tpu.dot_dimension_numbers<[1], [0], [0], [1], [0, 0, 1, 1], [], []>} : vector<8x32xbf16>, vector<32x32xbf16>, vector<8x32xf32> -> vector<8x32xf32>
    %c0_42 = arith.constant 0 : index
    %c0_43 = arith.constant 0 : index
    %69 = vector.load %arg4[%c0_42, %c0_43] : memref<32x8xf32, #tpu.memory_space<vmem>>, vector<32x8xf32>
    %70 = tpu.concatenate %59, %68 in 1 : vector<8x32xf32>, vector<8x32xf32> -> vector<8x64xf32>
    %cst_44 = arith.constant dense<0.000000e+00> : vector<32x64xf32>
    %71 = tpu.matmul %69, %70, %cst_44 {dimension_numbers = #tpu.dot_dimension_numbers<[1], [0], [0], [1], [0, 0, 1, 1], [], []>} : vector<32x8xf32>, vector<8x64xf32>, vector<32x64xf32> -> vector<32x64xf32>
    %72 = vector.extract_strided_slice %71 {offsets = [0, 0], sizes = [32, 32], strides = [1, 1]} : vector<32x64xf32> to vector<32x32xf32>
    %73 = arith.addf %52, %72 : vector<32x32xf32>
    %74 = arith.truncf %73 : vector<32x32xf32> to vector<32x32xbf16>
    %c0_45 = arith.constant 0 : index
    %c0_46 = arith.constant 0 : index
    %75 = vector.load %arg15[%c0_45, %c0_46] : memref<32x32xbf16, #tpu.memory_space<vmem>>, vector<32x32xbf16>
    %cst_47 = arith.constant dense<0.000000e+00> : vector<32x32xf32>
    %76 = tpu.matmul %74, %75, %cst_47 {dimension_numbers = #tpu.dot_dimension_numbers<[1], [0], [0], [1], [0, 0, 1, 1], [], []>} : vector<32x32xbf16>, vector<32x32xbf16>, vector<32x32xf32> -> vector<32x32xf32>
    %77 = vector.extract_strided_slice %71 {offsets = [0, 32], sizes = [32, 32], strides = [1, 1]} : vector<32x64xf32> to vector<32x32xf32>
    %78 = arith.addf %76, %77 : vector<32x32xf32>
    %c0_48 = arith.constant 0 : index
    %c0_49 = arith.constant 0 : index
    %79 = vector.load %arg17[%c0_48, %c0_49] : memref<1x32xf32, #tpu.memory_space<vmem>>, vector<1x32xf32>
    %80 = vector.broadcast %79 : vector<1x32xf32> to vector<32x32xf32>
    %81 = arith.addf %78, %80 : vector<32x32xf32>
    %82 = math.tanh %81 : vector<32x32xf32>
    %83 = arith.truncf %82 : vector<32x32xf32> to vector<32x32xbf16>
    %c0_50 = arith.constant 0 : index
    %c0_51 = arith.constant 0 : index
    %c0_52 = arith.constant 0 : index
    %84 = vector.load %arg18[%c0_50, %c0_51, %c0_52] : memref<4x32x32xbf16, #tpu.memory_space<vmem>>, vector<1x32x32xbf16>
    %85 = vector.shape_cast %84 : vector<1x32x32xbf16> to vector<32x32xbf16>
    %cst_53 = arith.constant dense<0.000000e+00> : vector<32x32xf32>
    %86 = tpu.matmul %83, %85, %cst_53 {dimension_numbers = #tpu.dot_dimension_numbers<[1], [0], [0], [1], [0, 0, 1, 1], [], []>} : vector<32x32xbf16>, vector<32x32xbf16>, vector<32x32xf32> -> vector<32x32xf32>
    %c0_54 = arith.constant 0 : index
    %c0_55 = arith.constant 0 : index
    %c0_56 = arith.constant 0 : index
    %87 = vector.load %arg19[%c0_54, %c0_55, %c0_56] : memref<4x1x32xf32, #tpu.memory_space<vmem>>, vector<1x1x32xf32>
    %88 = vector.shape_cast %87 : vector<1x1x32xf32> to vector<1x32xf32>
    %89 = vector.broadcast %88 : vector<1x32xf32> to vector<32x32xf32>
    %90 = arith.addf %86, %89 : vector<32x32xf32>
    %91 = math.tanh %90 : vector<32x32xf32>
    %92 = arith.truncf %91 : vector<32x32xf32> to vector<32x32xbf16>
    %c1 = arith.constant 1 : index
    %c0_57 = arith.constant 0 : index
    %c0_58 = arith.constant 0 : index
    %93 = vector.load %arg18[%c1, %c0_57, %c0_58] : memref<4x32x32xbf16, #tpu.memory_space<vmem>>, vector<1x32x32xbf16>
    %94 = vector.shape_cast %93 : vector<1x32x32xbf16> to vector<32x32xbf16>
    %cst_59 = arith.constant dense<0.000000e+00> : vector<32x32xf32>
    %95 = tpu.matmul %92, %94, %cst_59 {dimension_numbers = #tpu.dot_dimension_numbers<[1], [0], [0], [1], [0, 0, 1, 1], [], []>} : vector<32x32xbf16>, vector<32x32xbf16>, vector<32x32xf32> -> vector<32x32xf32>
    %c1_60 = arith.constant 1 : index
    %c0_61 = arith.constant 0 : index
    %c0_62 = arith.constant 0 : index
    %96 = vector.load %arg19[%c1_60, %c0_61, %c0_62] : memref<4x1x32xf32, #tpu.memory_space<vmem>>, vector<1x1x32xf32>
    %97 = vector.shape_cast %96 : vector<1x1x32xf32> to vector<1x32xf32>
    %98 = vector.broadcast %97 : vector<1x32xf32> to vector<32x32xf32>
    %99 = arith.addf %95, %98 : vector<32x32xf32>
    %100 = math.tanh %99 : vector<32x32xf32>
    %101 = arith.truncf %100 : vector<32x32xf32> to vector<32x32xbf16>
    %c2 = arith.constant 2 : index
    %c0_63 = arith.constant 0 : index
    %c0_64 = arith.constant 0 : index
    %102 = vector.load %arg18[%c2, %c0_63, %c0_64] : memref<4x32x32xbf16, #tpu.memory_space<vmem>>, vector<1x32x32xbf16>
    %103 = vector.shape_cast %102 : vector<1x32x32xbf16> to vector<32x32xbf16>
    %cst_65 = arith.constant dense<0.000000e+00> : vector<32x32xf32>
    %104 = tpu.matmul %101, %103, %cst_65 {dimension_numbers = #tpu.dot_dimension_numbers<[1], [0], [0], [1], [0, 0, 1, 1], [], []>} : vector<32x32xbf16>, vector<32x32xbf16>, vector<32x32xf32> -> vector<32x32xf32>
    %c2_66 = arith.constant 2 : index
    %c0_67 = arith.constant 0 : index
    %c0_68 = arith.constant 0 : index
    %105 = vector.load %arg19[%c2_66, %c0_67, %c0_68] : memref<4x1x32xf32, #tpu.memory_space<vmem>>, vector<1x1x32xf32>
    %106 = vector.shape_cast %105 : vector<1x1x32xf32> to vector<1x32xf32>
    %107 = vector.broadcast %106 : vector<1x32xf32> to vector<32x32xf32>
    %108 = arith.addf %104, %107 : vector<32x32xf32>
    %109 = math.tanh %108 : vector<32x32xf32>
    %110 = arith.truncf %109 : vector<32x32xf32> to vector<32x32xbf16>
    %c3 = arith.constant 3 : index
    %c0_69 = arith.constant 0 : index
    %c0_70 = arith.constant 0 : index
    %111 = vector.load %arg18[%c3, %c0_69, %c0_70] : memref<4x32x32xbf16, #tpu.memory_space<vmem>>, vector<1x32x32xbf16>
    %112 = vector.shape_cast %111 : vector<1x32x32xbf16> to vector<32x32xbf16>
    %cst_71 = arith.constant dense<0.000000e+00> : vector<32x32xf32>
    %113 = tpu.matmul %110, %112, %cst_71 {dimension_numbers = #tpu.dot_dimension_numbers<[1], [0], [0], [1], [0, 0, 1, 1], [], []>} : vector<32x32xbf16>, vector<32x32xbf16>, vector<32x32xf32> -> vector<32x32xf32>
    %c3_72 = arith.constant 3 : index
    %c0_73 = arith.constant 0 : index
    %c0_74 = arith.constant 0 : index
    %114 = vector.load %arg19[%c3_72, %c0_73, %c0_74] : memref<4x1x32xf32, #tpu.memory_space<vmem>>, vector<1x1x32xf32>
    %115 = vector.shape_cast %114 : vector<1x1x32xf32> to vector<1x32xf32>
    %116 = vector.broadcast %115 : vector<1x32xf32> to vector<32x32xf32>
    %117 = arith.addf %113, %116 : vector<32x32xf32>
    %118 = math.tanh %117 : vector<32x32xf32>
    %119 = arith.addf %118, %82 : vector<32x32xf32>
    %120 = arith.truncf %119 : vector<32x32xf32> to vector<32x32xbf16>
    %c0_75 = arith.constant 0 : index
    %c0_76 = arith.constant 0 : index
    %121 = vector.load %arg20[%c0_75, %c0_76] : memref<32x256xbf16, #tpu.memory_space<vmem>>, vector<32x256xbf16>
    %cst_77 = arith.constant dense<0.000000e+00> : vector<32x256xf32>
    %122 = tpu.matmul %120, %121, %cst_77 {dimension_numbers = #tpu.dot_dimension_numbers<[1], [0], [0], [1], [0, 0, 1, 1], [], []>} : vector<32x32xbf16>, vector<32x256xbf16>, vector<32x256xf32> -> vector<32x256xf32>
    %cst_78 = arith.constant dense<0xFF800000> : vector<32xf32>
    %123 = vector.multi_reduction <maximumf>, %122, %cst_78 [1] : vector<32x256xf32> to vector<32xf32>
    %124 = vector.shape_cast %123 : vector<32xf32> to vector<32x1xf32>
    %125 = vector.broadcast %124 : vector<32x1xf32> to vector<32x256xf32>
    %126 = arith.subf %122, %125 : vector<32x256xf32>
    %127 = math.exp %126 : vector<32x256xf32>
    %cst_79 = arith.constant dense<0.000000e+00> : vector<32xf32>
    %128 = vector.multi_reduction <add>, %127, %cst_79 [1] : vector<32x256xf32> to vector<32xf32>
    %129 = vector.shape_cast %128 : vector<32xf32> to vector<32x1xf32>
    %130 = tpu.reciprocal %129 {approx = true} : vector<32x1xf32> -> vector<32x1xf32>
    %131 = vector.broadcast %130 : vector<32x1xf32> to vector<32x256xf32>
    %132 = arith.mulf %127, %131 : vector<32x256xf32>
    %c0_80 = arith.constant 0 : index
    %c0_81 = arith.constant 0 : index
    %133 = vector.load %arg22[%c0_80, %c0_81] : memref<32x256xf32, #tpu.memory_space<vmem>>, vector<32x256xf32>
    tpu.vector_store %arg22[%c0_80, %c0_81], %132 {strides = array<i32>} : memref<32x256xf32, #tpu.memory_space<vmem>>, vector<32x256xf32>,
    return
  }
  func.func @transform_0(%arg0: i32) -> (i32, i32) {
    %c0_i32 = arith.constant 0 : i32
    %c0_i32_0 = arith.constant 0 : i32
    return %arg0, %c0_i32 : i32, i32
  }
  func.func @transform_1(%arg0: i32) -> (i32, i32) {
    %c0_i32 = arith.constant 0 : i32
    %c0_i32_0 = arith.constant 0 : i32
    return %arg0, %c0_i32 : i32, i32
  }
  func.func @transform_2(%arg0: i32) -> (i32, i32) {
    %c0_i32 = arith.constant 0 : i32
    %c0_i32_0 = arith.constant 0 : i32
    return %arg0, %c0_i32 : i32, i32
  }
  func.func @transform_3(%arg0: i32) -> (i32, i32) {
    %c0_i32 = arith.constant 0 : i32
    %c0_i32_0 = arith.constant 0 : i32
    %c0_i32_1 = arith.constant 0 : i32
    return %c0_i32, %c0_i32_0 : i32, i32
  }
  func.func @transform_4(%arg0: i32) -> (i32, i32) {
    %c0_i32 = arith.constant 0 : i32
    %c0_i32_0 = arith.constant 0 : i32
    %c0_i32_1 = arith.constant 0 : i32
    return %c0_i32, %c0_i32_0 : i32, i32
  }
  func.func @transform_5(%arg0: i32) -> (i32, i32) {
    %c0_i32 = arith.constant 0 : i32
    %c0_i32_0 = arith.constant 0 : i32
    %c0_i32_1 = arith.constant 0 : i32
    return %c0_i32, %c0_i32_0 : i32, i32
  }
  func.func @transform_6(%arg0: i32) -> (i32, i32) {
    %c0_i32 = arith.constant 0 : i32
    %c0_i32_0 = arith.constant 0 : i32
    %c0_i32_1 = arith.constant 0 : i32
    return %c0_i32, %c0_i32_0 : i32, i32
  }
  func.func @transform_7(%arg0: i32) -> (i32, i32) {
    %c0_i32 = arith.constant 0 : i32
    %c0_i32_0 = arith.constant 0 : i32
    %c0_i32_1 = arith.constant 0 : i32
    return %c0_i32, %c0_i32_0 : i32, i32
  }
  func.func @transform_8(%arg0: i32) -> (i32, i32) {
    %c0_i32 = arith.constant 0 : i32
    %c0_i32_0 = arith.constant 0 : i32
    %c0_i32_1 = arith.constant 0 : i32
    return %c0_i32, %c0_i32_0 : i32, i32
  }
  func.func @transform_9(%arg0: i32) -> (i32, i32) {
    %c0_i32 = arith.constant 0 : i32
    %c0_i32_0 = arith.constant 0 : i32
    %c0_i32_1 = arith.constant 0 : i32
    return %c0_i32, %c0_i32_0 : i32, i32
  }
  func.func @transform_10(%arg0: i32) -> (i32, i32) {
    %c0_i32 = arith.constant 0 : i32
    %c0_i32_0 = arith.constant 0 : i32
    %c0_i32_1 = arith.constant 0 : i32
    return %c0_i32, %c0_i32_0 : i32, i32
  }
  func.func @transform_11(%arg0: i32) -> (i32, i32) {
    %c0_i32 = arith.constant 0 : i32
    %c0_i32_0 = arith.constant 0 : i32
    %c0_i32_1 = arith.constant 0 : i32
    return %c0_i32, %c0_i32_0 : i32, i32
  }
  func.func @transform_12(%arg0: i32) -> (i32, i32) {
    %c0_i32 = arith.constant 0 : i32
    %c0_i32_0 = arith.constant 0 : i32
    %c0_i32_1 = arith.constant 0 : i32
    return %c0_i32, %c0_i32_0 : i32, i32
  }
  func.func @transform_13(%arg0: i32) -> (i32, i32) {
    %c0_i32 = arith.constant 0 : i32
    %c0_i32_0 = arith.constant 0 : i32
    %c0_i32_1 = arith.constant 0 : i32
    return %c0_i32, %c0_i32_0 : i32, i32
  }
  func.func @transform_14(%arg0: i32) -> (i32, i32) {
    %c0_i32 = arith.constant 0 : i32
    %c0_i32_0 = arith.constant 0 : i32
    %c0_i32_1 = arith.constant 0 : i32
    return %c0_i32, %c0_i32_0 : i32, i32
  }
  func.func @transform_15(%arg0: i32) -> (i32, i32) {
    %c0_i32 = arith.constant 0 : i32
    %c0_i32_0 = arith.constant 0 : i32
    %c0_i32_1 = arith.constant 0 : i32
    return %c0_i32, %c0_i32_0 : i32, i32
  }
  func.func @transform_16(%arg0: i32) -> (i32, i32) {
    %c0_i32 = arith.constant 0 : i32
    %c0_i32_0 = arith.constant 0 : i32
    %c0_i32_1 = arith.constant 0 : i32
    return %c0_i32, %c0_i32_0 : i32, i32
  }
  func.func @transform_17(%arg0: i32) -> (i32, i32, i32) {
    %c0_i32 = arith.constant 0 : i32
    %c0_i32_0 = arith.constant 0 : i32
    %c0_i32_1 = arith.constant 0 : i32
    %c0_i32_2 = arith.constant 0 : i32
    return %c0_i32, %c0_i32_0, %c0_i32_1 : i32, i32, i32
  }
  func.func @transform_18(%arg0: i32) -> (i32, i32, i32) {
    %c0_i32 = arith.constant 0 : i32
    %c0_i32_0 = arith.constant 0 : i32
    %c0_i32_1 = arith.constant 0 : i32
    %c0_i32_2 = arith.constant 0 : i32
    return %c0_i32, %c0_i32_0, %c0_i32_1 : i32, i32, i32
  }
  func.func @transform_19(%arg0: i32) -> (i32, i32) {
    %c0_i32 = arith.constant 0 : i32
    %c0_i32_0 = arith.constant 0 : i32
    %c0_i32_1 = arith.constant 0 : i32
    return %c0_i32, %c0_i32_0 : i32, i32
  }
  func.func @transform_20(%arg0: i32) -> (i32, i32) {
    %c0_i32 = arith.constant 0 : i32
    %c0_i32_0 = arith.constant 0 : i32
    return %arg0, %c0_i32 : i32, i32
  }
  func.func @transform_21(%arg0: i32) -> (i32, i32) {
    %c0_i32 = arith.constant 0 : i32
    %c0_i32_0 = arith.constant 0 : i32
    return %arg0, %c0_i32 : i32, i32
  }
  func.func @transform_22(%arg0: i32) -> (i32, i32) {
    %c0_i32 = arith.constant 0 : i32
    %c0_i32_0 = arith.constant 0 : i32
    return %arg0, %c0_i32 : i32, i32
  }
}

</mosaic_0001>

<llo_original>
// kernel: tpu_custom_call.1
$region0: #{tpu_custom_call.1}
  #allocation0 [shape = 'u32[]', space=smem, size = 0x4, offset = 0x4, fixed_abs, tag = 'smem constant byte address 0x4 - core index']
  #allocation1 [shape = 'u32[144,128]{1,0:T(1,128)}', space=vmem, size = 0x12000, scoped, tag = 'internal scratch']
  %s0 = inlined_call_operand.hbm [shape: f32[32,256], index: 0, kind: input, shape index: {}]
  %s1 = inlined_call_operand.hbm [shape: f32[32,64], index: 1, kind: input, shape index: {}]
  %s2 = inlined_call_operand.hbm [shape: f32[8,32], index: 2, kind: input, shape index: {}]
  %s3 = inlined_call_operand.vmem [shape: f32[32,8], index: 3, kind: input, shape index: {}]
  %s4 = inlined_call_operand.vmem [shape: bf16[256,256], index: 4, kind: input, shape index: {}]
  %s5 = inlined_call_operand.vmem [shape: f32[1,128], index: 5, kind: input, shape index: {}]
  %s6 = inlined_call_operand.hbm [shape: bf16[128,128], index: 6, kind: input, shape index: {}]
  %s7 = inlined_call_operand.hbm [shape: f32[1,128], index: 7, kind: input, shape index: {}]
  %s8 = inlined_call_operand.vmem [shape: bf16[128,288], index: 8, kind: input, shape index: {}]
  %s9 = inlined_call_operand.vmem [shape: bf16[64,288], index: 9, kind: input, shape index: {}]
  %s10 = inlined_call_operand.hbm [shape: f32[1,256], index: 10, kind: input, shape index: {}]
  %s11 = inlined_call_operand.hbm [shape: f32[1,32], index: 11, kind: input, shape index: {}]
  %s12 = inlined_call_operand.vmem [shape: bf16[128,96], index: 12, kind: input, shape index: {}]
  %s13 = inlined_call_operand.hbm [shape: f32[1,64], index: 13, kind: input, shape index: {}]
  %s14 = inlined_call_operand.hbm [shape: bf16[32,32], index: 14, kind: input, shape index: {}]
  %s15 = inlined_call_operand.hbm [shape: bf16[32,32], index: 15, kind: input, shape index: {}]
  %s16 = inlined_call_operand.vmem [shape: f32[1,32], index: 16, kind: input, shape index: {}]
  %s17 = inlined_call_operand.hbm [shape: bf16[4,32,32], index: 17, kind: input, shape index: {}]
  %s18 = inlined_call_operand.vmem [shape: f32[4,1,32], index: 18, kind: input, shape index: {}]
  %s19 = inlined_call_operand.vmem [shape: bf16[32,256], index: 19, kind: input, shape index: {}]
  %s20 = inlined_call_operand.hbm [shape: f32[32,256], index: 20, kind: output, shape index: {0}]
  %s21 = inlined_call_operand.hbm [shape: f32[32,256], index: 21, kind: output, shape index: {1}]
  %s22 = inlined_call_operand.hbm [shape: f32[8,64], index: 22, kind: output, shape index: {2}]
  %23 = xla_tuple %s20, %s21, %s22
  %s24 = sld [smem:[#allocation0]]
  $region150: #{tpu_custom_call.1} parent=0
    _
  %s26 = ssub.s32 1, %s24
  %s27 = scalar_select 0, %s26, %s24
  $region1: #{tpu_custom_call.1} parent=0
    #allocation2 [shape = 'u8[32768]{0}', space=vmem, size = 0x8000, scoped, tag = 'input window, operand 0, single buffered']
    #allocation3 [shape = 's32[1]{0}', space=sflag, size = 0x4, scoped, tag = 'scoped memory for tpu_custom_call.1']
    #allocation4 [shape = 's32[1]{0}', space=sflag, size = 0x4, scoped, tag = 'scoped memory for tpu_custom_call.1']
    #allocation5 [shape = 'u8[16384]{0}', space=vmem, size = 0x4000, scoped, tag = 'input window, operand 1, single buffered']
    #allocation6 [shape = 's32[1]{0}', space=sflag, size = 0x4, scoped, tag = 'scoped memory for tpu_custom_call.1']
    #allocation7 [shape = 'u8[4096]{0}', space=vmem, size = 0x1000, scoped, tag = 'input window, operand 2, single buffered']
    #allocation8 [shape = 'u8[32768]{0}', space=vmem, size = 0x8000, scoped, tag = 'input window, operand 6, single buffered']
    #allocation9 [shape = 's32[1]{0}', space=sflag, size = 0x4, scoped, tag = 'scoped memory for tpu_custom_call.1']
    #allocation10 [shape = 'u8[512]{0}', space=vmem, size = 0x400, scoped, tag = 'input window, operand 7, single buffered']
    #allocation11 [shape = 'u8[1024]{0}', space=vmem, size = 0x400, scoped, tag = 'input window, operand 10, single buffered']
    #allocation12 [shape = 's32[1]{0}', space=sflag, size = 0x4, scoped, tag = 'scoped memory for tpu_custom_call.1']
    #allocation13 [shape = 'u8[512]{0}', space=vmem, size = 0x400, scoped, tag = 'input window, operand 11, single buffered']
    #allocation14 [shape = 'u8[512]{0}', space=vmem, size = 0x400, scoped, tag = 'input window, operand 13, single buffered']
    #allocation15 [shape = 's32[1]{0}', space=sflag, size = 0x4, scoped, tag = 'scoped memory for tpu_custom_call.1']
    #allocation16 [shape = 'u8[8192]{0}', space=vmem, size = 0x2000, scoped, tag = 'input window, operand 14, single buffered']
    #allocation17 [shape = 'u8[8192]{0}', space=vmem, size = 0x2000, scoped, tag = 'input window, operand 15, single buffered']
    #allocation18 [shape = 's32[1]{0}', space=sflag, size = 0x4, scoped, tag = 'scoped memory for tpu_custom_call.1']
    #allocation19 [shape = 'u8[32768]{0}', space=vmem, size = 0x8000, scoped, tag = 'input window, operand 17, single buffered']
    #allocation20 [shape = 'u8[32768]{0}', space=vmem, size = 0x8000, scoped, tag = 'output window, operand 0, single buffered']
    #allocation21 [shape = 'u8[32768]{0}', space=vmem, size = 0x8000, scoped, tag = 'output window, operand 1, single buffered']
    #allocation22 [shape = 's32[1]{0}', space=sflag, size = 0x4, scoped, tag = 'scoped memory for tpu_custom_call.1']
    #allocation23 [shape = 'u8[4096]{0}', space=vmem, size = 0x1000, scoped, tag = 'output window, operand 2, single buffered']
    %28 = vsyncpa [#allocation3], 0
    %29 = vsyncpa [#allocation6], 0
    %30 = vsyncpa [#allocation9], 0
    %31 = vsyncpa [#allocation12], 0
    %32 = vsyncpa [#allocation15], 0
    %33 = vsyncpa [#allocation18], 0
    %34 = vsyncpa [#allocation4], 0
    %35 = vsyncpa [#allocation22], 0
    // Predicated region
    $region2: #{tpu_custom_call.1} parent=1 // pred_check
      _
    $region3: #{tpu_custom_call.1} parent=1 // pred_check_branch
      %37 = sbr.rel (0) target = $region5
    $region4: #{tpu_custom_call.1} parent=1 // pred_region
      %s39 = ssub.s32 1024, 1024
      %40 = vsyncadd [#allocation3], %s39
      %s41 = sshll.u32 [#allocation2], 4
      %s42 = int_to_ptr.vmem [resolvable:$true] %s41
      %47 = dma.hbm_to_vmem [thread:$0]  %s0, 1024, %s42, [#allocation3], 256, 256, 16
    $region5: #{tpu_custom_call.1} parent=1 // pred_fallthru
      _
    // Predicated region
    $region6: #{tpu_custom_call.1} parent=1 // pred_check
      _
    $region7: #{tpu_custom_call.1} parent=1 // pred_check_branch
      %49 = sbr.rel (0) target = $region9
    $region8: #{tpu_custom_call.1} parent=1 // pred_region
      %s51 = ssub.s32 512, 512
      %52 = vsyncadd [#allocation6], %s51
      %s53 = sshll.u32 [#allocation5], 4
      %s54 = int_to_ptr.vmem [resolvable:$true] %s53
      %59 = dma.hbm_to_vmem [thread:$0]  %s1, 512, %s54, [#allocation6], 128, 128, 8
    $region9: #{tpu_custom_call.1} parent=1 // pred_fallthru
      _
    // Predicated region
    $region10: #{tpu_custom_call.1} parent=1 // pred_check
      _
    $region11: #{tpu_custom_call.1} parent=1 // pred_check_branch
      %61 = sbr.rel (0) target = $region13
    $region12: #{tpu_custom_call.1} parent=1 // pred_region
      %s63 = ssub.s32 128, 128
      %64 = vsyncadd [#allocation6], %s63
      %s66 = sshll.u32 [#allocation7], 4
      %s67 = int_to_ptr.vmem [resolvable:$true] %s66
      %69 = dma.hbm_to_vmem [thread:$0]  %s2, 128, %s67, [#allocation6]
    $region13: #{tpu_custom_call.1} parent=1 // pred_fallthru
      _
    // Predicated region
    $region14: #{tpu_custom_call.1} parent=1 // pred_check
      _
    $region15: #{tpu_custom_call.1} parent=1 // pred_check_branch
      %71 = sbr.rel (0) target = $region17
    $region16: #{tpu_custom_call.1} parent=1 // pred_region
      _
    $region17: #{tpu_custom_call.1} parent=1 // pred_fallthru
      _
    // Predicated region
    $region18: #{tpu_custom_call.1} parent=1 // pred_check
      _
    $region19: #{tpu_custom_call.1} parent=1 // pred_check_branch
      %73 = sbr.rel (0) target = $region21
    $region20: #{tpu_custom_call.1} parent=1 // pred_region
      _
    $region21: #{tpu_custom_call.1} parent=1 // pred_fallthru
      _
    // Predicated region
    $region22: #{tpu_custom_call.1} parent=1 // pred_check
      _
    $region23: #{tpu_custom_call.1} parent=1 // pred_check_branch
      %75 = sbr.rel (0) target = $region25
    $region24: #{tpu_custom_call.1} parent=1 // pred_region
      _
    $region25: #{tpu_custom_call.1} parent=1 // pred_fallthru
      _
    // Predicated region
    $region26: #{tpu_custom_call.1} parent=1 // pred_check
      _
    $region27: #{tpu_custom_call.1} parent=1 // pred_check_branch
      %77 = sbr.rel (0) target = $region29
    $region28: #{tpu_custom_call.1} parent=1 // pred_region
      %s79 = ssub.s32 1024, 1024
      %80 = vsyncadd [#allocation9], %s79
      %s81 = sshll.u32 [#allocation8], 4
      %s82 = int_to_ptr.vmem [resolvable:$true] %s81
      %87 = dma.hbm_to_vmem [thread:$0]  %s6, 1024, %s82, [#allocation9], 64, 64, 4
    $region29: #{tpu_custom_call.1} parent=1 // pred_fallthru
      _
    // Predicated region
    $region30: #{tpu_custom_call.1} parent=1 // pred_check
      _
    $region31: #{tpu_custom_call.1} parent=1 // pred_check_branch
      %89 = sbr.rel (0) target = $region33
    $region32: #{tpu_custom_call.1} parent=1 // pred_region
      %s91 = ssub.s32 16, 16
      %92 = vsyncadd [#allocation9], %s91
      %s94 = sshll.u32 [#allocation10], 4
      %s95 = int_to_ptr.vmem [resolvable:$true] %s94
      %97 = dma.hbm_to_vmem [thread:$0]  %s7, 16, %s95, [#allocation9]
    $region33: #{tpu_custom_call.1} parent=1 // pred_fallthru
      _
    // Predicated region
    $region34: #{tpu_custom_call.1} parent=1 // pred_check
      _
    $region35: #{tpu_custom_call.1} parent=1 // pred_check_branch
      %99 = sbr.rel (0) target = $region37
    $region36: #{tpu_custom_call.1} parent=1 // pred_region
      _
    $region37: #{tpu_custom_call.1} parent=1 // pred_fallthru
      _
    // Predicated region
    $region38: #{tpu_custom_call.1} parent=1 // pred_check
      _
    $region39: #{tpu_custom_call.1} parent=1 // pred_check_branch
      %101 = sbr.rel (0) target = $region41
    $region40: #{tpu_custom_call.1} parent=1 // pred_region
      _
    $region41: #{tpu_custom_call.1} parent=1 // pred_fallthru
      _
    // Predicated region
    $region42: #{tpu_custom_call.1} parent=1 // pred_check
      _
    $region43: #{tpu_custom_call.1} parent=1 // pred_check_branch
      %103 = sbr.rel (0) target = $region45
    $region44: #{tpu_custom_call.1} parent=1 // pred_region
      %s105 = ssub.s32 32, 32
      %106 = vsyncadd [#allocation12], %s105
      %s108 = sshll.u32 [#allocation11], 4
      %s109 = int_to_ptr.vmem [resolvable:$true] %s108
      %111 = dma.hbm_to_vmem [thread:$0]  %s10, 32, %s109, [#allocation12]
    $region45: #{tpu_custom_call.1} parent=1 // pred_fallthru
      _
    // Predicated region
    $region46: #{tpu_custom_call.1} parent=1 // pred_check
      _
    $region47: #{tpu_custom_call.1} parent=1 // pred_check_branch
      %113 = sbr.rel (0) target = $region49
    $region48: #{tpu_custom_call.1} parent=1 // pred_region
      %s115 = ssub.s32 16, 16
      %116 = vsyncadd [#allocation12], %s115
      %s118 = sshll.u32 [#allocation13], 4
      %s119 = int_to_ptr.vmem [resolvable:$true] %s118
      %121 = dma.hbm_to_vmem [thread:$0]  %s11, 16, %s119, [#allocation12]
    $region49: #{tpu_custom_call.1} parent=1 // pred_fallthru
      _
    // Predicated region
    $region50: #{tpu_custom_call.1} parent=1 // pred_check
      _
    $region51: #{tpu_custom_call.1} parent=1 // pred_check_branch
      %123 = sbr.rel (0) target = $region53
    $region52: #{tpu_custom_call.1} parent=1 // pred_region
      _
    $region53: #{tpu_custom_call.1} parent=1 // pred_fallthru
      _
    // Predicated region
    $region54: #{tpu_custom_call.1} parent=1 // pred_check
      _
    $region55: #{tpu_custom_call.1} parent=1 // pred_check_branch
      %125 = sbr.rel (0) target = $region57
    $region56: #{tpu_custom_call.1} parent=1 // pred_region
      %s127 = ssub.s32 16, 16
      %128 = vsyncadd [#allocation15], %s127
      %s130 = sshll.u32 [#allocation14], 4
      %s131 = int_to_ptr.vmem [resolvable:$true] %s130
      %133 = dma.hbm_to_vmem [thread:$0]  %s13, 16, %s131, [#allocation15]
    $region57: #{tpu_custom_call.1} parent=1 // pred_fallthru
      _
    // Predicated region
    $region58: #{tpu_custom_call.1} parent=1 // pred_check
      _
    $region59: #{tpu_custom_call.1} parent=1 // pred_check_branch
      %135 = sbr.rel (0) target = $region61
    $region60: #{tpu_custom_call.1} parent=1 // pred_region
      %s137 = ssub.s32 256, 256
      %138 = vsyncadd [#allocation15], %s137
      %s139 = sshll.u32 [#allocation16], 4
      %s140 = int_to_ptr.vmem [resolvable:$true] %s139
      %145 = dma.hbm_to_vmem [thread:$0]  %s14, 256, %s140, [#allocation15], 64, 64, 4
    $region61: #{tpu_custom_call.1} parent=1 // pred_fallthru
      _
    // Predicated region
    $region62: #{tpu_custom_call.1} parent=1 // pred_check
      _
    $region63: #{tpu_custom_call.1} parent=1 // pred_check_branch
      %147 = sbr.rel (0) target = $region65
    $region64: #{tpu_custom_call.1} parent=1 // pred_region
      %s149 = ssub.s32 256, 256
      %150 = vsyncadd [#allocation18], %s149
      %s151 = sshll.u32 [#allocation17], 4
      %s152 = int_to_ptr.vmem [resolvable:$true] %s151
      %157 = dma.hbm_to_vmem [thread:$0]  %s15, 256, %s152, [#allocation18], 64, 64, 4
    $region65: #{tpu_custom_call.1} parent=1 // pred_fallthru
      _
    // Predicated region
    $region66: #{tpu_custom_call.1} parent=1 // pred_check
      _
    $region67: #{tpu_custom_call.1} parent=1 // pred_check_branch
      %159 = sbr.rel (0) target = $region69
    $region68: #{tpu_custom_call.1} parent=1 // pred_region
      _
    $region69: #{tpu_custom_call.1} parent=1 // pred_fallthru
      _
    // Predicated region
    $region70: #{tpu_custom_call.1} parent=1 // pred_check
      _
    $region71: #{tpu_custom_call.1} parent=1 // pred_check_branch
      %161 = sbr.rel (0) target = $region73
    $region72: #{tpu_custom_call.1} parent=1 // pred_region
      %s163 = ssub.s32 1024, 1024
      %164 = vsyncadd [#allocation18], %s163
      %s165 = sshll.u32 [#allocation19], 4
      %s166 = int_to_ptr.vmem [resolvable:$true] %s165
      %171 = dma.hbm_to_vmem [thread:$0]  %s17, 1024, %s166, [#allocation18], 64, 64, 4
    $region73: #{tpu_custom_call.1} parent=1 // pred_fallthru
      _
    // Predicated region
    $region74: #{tpu_custom_call.1} parent=1 // pred_check
      _
    $region75: #{tpu_custom_call.1} parent=1 // pred_check_branch
      %173 = sbr.rel (0) target = $region77
    $region76: #{tpu_custom_call.1} parent=1 // pred_region
      _
    $region77: #{tpu_custom_call.1} parent=1 // pred_fallthru
      _
    // Predicated region
    $region78: #{tpu_custom_call.1} parent=1 // pred_check
      _
    $region79: #{tpu_custom_call.1} parent=1 // pred_check_branch
      %175 = sbr.rel (0) target = $region81
    $region80: #{tpu_custom_call.1} parent=1 // pred_region
      _
    $region81: #{tpu_custom_call.1} parent=1 // pred_fallthru
      _
    // Predicated region
    $region82: #{tpu_custom_call.1} parent=1 // pred_check
      _
    $region83: #{tpu_custom_call.1} parent=1 // pred_check_branch
      %177 = sbr.rel (0) target = $region85
    $region84: #{tpu_custom_call.1} parent=1 // pred_region
      %178 = dma.done [#allocation3], 1024
    $region85: #{tpu_custom_call.1} parent=1 // pred_fallthru
      _
    // Predicated region
    $region86: #{tpu_custom_call.1} parent=1 // pred_check
      _
    $region87: #{tpu_custom_call.1} parent=1 // pred_check_branch
      %180 = sbr.rel (0) target = $region89
    $region88: #{tpu_custom_call.1} parent=1 // pred_region
      %181 = dma.done [#allocation6], 512
    $region89: #{tpu_custom_call.1} parent=1 // pred_fallthru
      _
    // Predicated region
    $region90: #{tpu_custom_call.1} parent=1 // pred_check
      _
    $region91: #{tpu_custom_call.1} parent=1 // pred_check_branch
      %183 = sbr.rel (0) target = $region93
    $region92: #{tpu_custom_call.1} parent=1 // pred_region
      %184 = dma.done [#allocation6], 128
    $region93: #{tpu_custom_call.1} parent=1 // pred_fallthru
      _
    // Predicated region
    $region94: #{tpu_custom_call.1} parent=1 // pred_check
      _
    $region95: #{tpu_custom_call.1} parent=1 // pred_check_branch
      %186 = sbr.rel (0) target = $region97
    $region96: #{tpu_custom_call.1} parent=1 // pred_region
      %187 = dma.done [#allocation9], 1024
    $region97: #{tpu_custom_call.1} parent=1 // pred_fallthru
      _
    // Predicated region
    $region98: #{tpu_custom_call.1} parent=1 // pred_check
      _
    $region99: #{tpu_custom_call.1} parent=1 // pred_check_branch
      %189 = sbr.rel (0) target = $region101
    $region100: #{tpu_custom_call.1} parent=1 // pred_region
      %190 = dma.done [#allocation9], 16
    $region101: #{tpu_custom_call.1} parent=1 // pred_fallthru
      _
    // Predicated region
    $region102: #{tpu_custom_call.1} parent=1 // pred_check
      _
    $region103: #{tpu_custom_call.1} parent=1 // pred_check_branch
      %192 = sbr.rel (0) target = $region105
    $region104: #{tpu_custom_call.1} parent=1 // pred_region
      %193 = dma.done [#allocation12], 32
    $region105: #{tpu_custom_call.1} parent=1 // pred_fallthru
      _
    // Predicated region
    $region106: #{tpu_custom_call.1} parent=1 // pred_check
      _
    $region107: #{tpu_custom_call.1} parent=1 // pred_check_branch
      %195 = sbr.rel (0) target = $region109
    $region108: #{tpu_custom_call.1} parent=1 // pred_region
      %196 = dma.done [#allocation12], 16
    $region109: #{tpu_custom_call.1} parent=1 // pred_fallthru
      _
    // Predicated region
    $region110: #{tpu_custom_call.1} parent=1 // pred_check
      _
    $region111: #{tpu_custom_call.1} parent=1 // pred_check_branch
      %198 = sbr.rel (0) target = $region113
    $region112: #{tpu_custom_call.1} parent=1 // pred_region
      %199 = dma.done [#allocation15], 16
    $region113: #{tpu_custom_call.1} parent=1 // pred_fallthru
      _
    // Predicated region
    $region114: #{tpu_custom_call.1} parent=1 // pred_check
      _
    $region115: #{tpu_custom_call.1} parent=1 // pred_check_branch
      %201 = sbr.rel (0) target = $region117
    $region116: #{tpu_custom_call.1} parent=1 // pred_region
      %202 = dma.done [#allocation15], 256
    $region117: #{tpu_custom_call.1} parent=1 // pred_fallthru
      _
    // Predicated region
    $region118: #{tpu_custom_call.1} parent=1 // pred_check
      _
    $region119: #{tpu_custom_call.1} parent=1 // pred_check_branch
      %204 = sbr.rel (0) target = $region121
    $region120: #{tpu_custom_call.1} parent=1 // pred_region
      %205 = dma.done [#allocation18], 256
    $region121: #{tpu_custom_call.1} parent=1 // pred_fallthru
      _
    // Predicated region
    $region122: #{tpu_custom_call.1} parent=1 // pred_check
      _
    $region123: #{tpu_custom_call.1} parent=1 // pred_check_branch
      %207 = sbr.rel (0) target = $region125
    $region124: #{tpu_custom_call.1} parent=1 // pred_region
      %208 = dma.done [#allocation18], 1024
    $region125: #{tpu_custom_call.1} parent=1 // pred_fallthru
      _
    %v210 = vld [vmem:[#allocation2] sm:$0xff]
    %v211 = vld [vmem:[#allocation2 + $0x8] sm:$0xff]
    %v212 = vld [vmem:[#allocation2 + $0x10] sm:$0xff]
    %v213 = vld [vmem:[#allocation2 + $0x18] sm:$0xff]
    %v214 = vld [vmem:[#allocation2 + $0x20] sm:$0xff]
    %v215 = vld [vmem:[#allocation2 + $0x28] sm:$0xff]
    %v216 = vld [vmem:[#allocation2 + $0x30] sm:$0xff]
    %v217 = vld [vmem:[#allocation2 + $0x38] sm:$0xff]
    %v218 = vld [vmem:[#allocation5] sm:$0xff]
    %v219 = vld [vmem:[#allocation5 + $0x8] sm:$0xff]
    %v220 = vld [vmem:[#allocation5 + $0x10] sm:$0xff]
    %v221 = vld [vmem:[#allocation5 + $0x18] sm:$0xff]
    %v222 = vand.u32 2147483647, %v210
    %v223 = vand.u32 2147483647, %v211
    %v224 = vand.u32 2147483647, %v212
    %v225 = vand.u32 2147483647, %v213
    %v226 = vand.u32 2147483647, %v214
    %v227 = vand.u32 2147483647, %v215
    %v228 = vand.u32 2147483647, %v216
    %v229 = vand.u32 2147483647, %v217
    %v230 = vadd.f32 %v222, %v223
    %231 = vadd.xlane.f32.xlu0 %v230
    %v232 = vpop.xlane.xlu0 %231
    %v233 = vadd.f32 %v224, %v225
    %234 = vadd.xlane.f32.xlu0 %v233
    %v235 = vpop.xlane.xlu0 %234
    %v236 = vadd.f32 %v226, %v227
    %237 = vadd.xlane.f32.xlu0 %v236
    %v238 = vpop.xlane.xlu0 %237
    %v239 = vadd.f32 %v228, %v229
    %240 = vadd.xlane.f32.xlu0 %v239
    %v241 = vpop.xlane.xlu0 %240
    %v242 = vmax.f32 %v232, 1e-12
    %v243 = vmax.f32 %v235, 1e-12
    %v244 = vmax.f32 %v238, 1e-12
    %v245 = vmax.f32 %v241, 1e-12
    %v246 = vrcp.pop %v242
    %v247 = vmul.f32 %v210, %v246
    %v248 = vmul.f32 %v211, %v246
    %v249 = vrcp.pop %v243
    %v250 = vmul.f32 %v212, %v249
    %v251 = vmul.f32 %v213, %v249
    %v252 = vrcp.pop %v244
    %v253 = vmul.f32 %v214, %v252
    %v254 = vmul.f32 %v215, %v252
    %v255 = vrcp.pop %v245
    %v256 = vmul.f32 %v216, %v255
    %v257 = vmul.f32 %v217, %v255
    %258 = vst [vmem:[#allocation20] sm:$0xff] %v247
    %259 = vst [vmem:[#allocation20 + $0x8] sm:$0xff] %v248
    %260 = vst [vmem:[#allocation20 + $0x10] sm:$0xff] %v250
    %261 = vst [vmem:[#allocation20 + $0x18] sm:$0xff] %v251
    %262 = vst [vmem:[#allocation20 + $0x20] sm:$0xff] %v253
    %263 = vst [vmem:[#allocation20 + $0x28] sm:$0xff] %v254
    %264 = vst [vmem:[#allocation20 + $0x30] sm:$0xff] %v256
    %265 = vst [vmem:[#allocation20 + $0x38] sm:$0xff] %v257
    %v266 = vpack.c.bf16 %v250, %v247
    %v267 = vpack.c.bf16 %v251, %v248
    %v268 = vpack.c.bf16 %v256, %v253
    %v269 = vpack.c.bf16 %v257, %v254
    %v270 = vld [vmem:[%s4] sm:$0xff]
    %v271 = vld [vmem:[%s4 + $0x8] sm:$0xff]
    %v272 = vld [vmem:[%s4 + $0x10] sm:$0xff]
    %v273 = vld [vmem:[%s4 + $0x18] sm:$0xff]
    %v274 = vld [vmem:[%s4 + $0x20] sm:$0xff]
    %v275 = vld [vmem:[%s4 + $0x28] sm:$0xff]
    %v276 = vld [vmem:[%s4 + $0x30] sm:$0xff]
    %v277 = vld [vmem:[%s4 + $0x38] sm:$0xff]
    %v278 = vld [vmem:[%s4 + $0x40] sm:$0xff]
    %v279 = vld [vmem:[%s4 + $0x48] sm:$0xff]
    %v280 = vld [vmem:[%s4 + $0x50] sm:$0xff]
    %v281 = vld [vmem:[%s4 + $0x58] sm:$0xff]
    %v282 = vld [vmem:[%s4 + $0x60] sm:$0xff]
    %v283 = vld [vmem:[%s4 + $0x68] sm:$0xff]
    %v284 = vld [vmem:[%s4 + $0x70] sm:$0xff]
    %v285 = vld [vmem:[%s4 + $0x78] sm:$0xff]
    %v286 = vld [vmem:[%s4 + $0x80] sm:$0xff]
    %v287 = vld [vmem:[%s4 + $0x88] sm:$0xff]
    %v288 = vld [vmem:[%s4 + $0x90] sm:$0xff]
    %v289 = vld [vmem:[%s4 + $0x98] sm:$0xff]
    %v290 = vld [vmem:[%s4 + $0xa0] sm:$0xff]
    %v291 = vld [vmem:[%s4 + $0xa8] sm:$0xff]
    %v292 = vld [vmem:[%s4 + $0xb0] sm:$0xff]
    %v293 = vld [vmem:[%s4 + $0xb8] sm:$0xff]
    %v294 = vld [vmem:[%s4 + $0xc0] sm:$0xff]
    %v295 = vld [vmem:[%s4 + $0xc8] sm:$0xff]
    %v296 = vld [vmem:[%s4 + $0xd0] sm:$0xff]
    %v297 = vld [vmem:[%s4 + $0xd8] sm:$0xff]
    %v298 = vld [vmem:[%s4 + $0xe0] sm:$0xff]
    %v299 = vld [vmem:[%s4 + $0xe8] sm:$0xff]
    %v300 = vld [vmem:[%s4 + $0xf0] sm:$0xff]
    %v301 = vld [vmem:[%s4 + $0xf8] sm:$0xff]
    %v334 = vunpack.c.l.b16 %v270
    %v335 = vunpack.c.h.b16 %v270
    %v336 = vunpack.c.l.b16 %v271
    %v337 = vunpack.c.h.b16 %v271
    %v338 = vunpack.c.l.b16 %v272
    %v339 = vunpack.c.h.b16 %v272
    %v340 = vunpack.c.l.b16 %v273
    %v341 = vunpack.c.h.b16 %v273
    %v342 = vunpack.c.l.b16 %v274
    %v343 = vunpack.c.h.b16 %v274
    %v344 = vunpack.c.l.b16 %v275
    %v345 = vunpack.c.h.b16 %v275
    %v346 = vunpack.c.l.b16 %v276
    %v347 = vunpack.c.h.b16 %v276
    %v348 = vunpack.c.l.b16 %v277
    %v349 = vunpack.c.h.b16 %v277
    %v350 = vunpack.c.l.b16 %v278
    %v351 = vunpack.c.h.b16 %v278
    %v352 = vunpack.c.l.b16 %v279
    %v353 = vunpack.c.h.b16 %v279
    %v354 = vunpack.c.l.b16 %v280
    %v355 = vunpack.c.h.b16 %v280
    %v356 = vunpack.c.l.b16 %v281
    %v357 = vunpack.c.h.b16 %v281
    %v358 = vunpack.c.l.b16 %v282
    %v359 = vunpack.c.h.b16 %v282
    %v360 = vunpack.c.l.b16 %v283
    %v361 = vunpack.c.h.b16 %v283
    %v362 = vunpack.c.l.b16 %v284
    %v363 = vunpack.c.h.b16 %v284
    %v364 = vunpack.c.l.b16 %v285
    %v365 = vunpack.c.h.b16 %v285
    %v366 = vunpack.c.l.b16 %v286
    %v367 = vunpack.c.h.b16 %v286
    %v368 = vunpack.c.l.b16 %v287
    %v369 = vunpack.c.h.b16 %v287
    %v370 = vunpack.c.l.b16 %v288
    %v371 = vunpack.c.h.b16 %v288
    %v372 = vunpack.c.l.b16 %v289
    %v373 = vunpack.c.h.b16 %v289
    %v374 = vunpack.c.l.b16 %v290
    %v375 = vunpack.c.h.b16 %v290
    %v376 = vunpack.c.l.b16 %v291
    %v377 = vunpack.c.h.b16 %v291
    %v378 = vunpack.c.l.b16 %v292
    %v379 = vunpack.c.h.b16 %v292
    %v380 = vunpack.c.l.b16 %v293
    %v381 = vunpack.c.h.b16 %v293
    %v382 = vunpack.c.l.b16 %v294
    %v383 = vunpack.c.h.b16 %v294
    %v384 = vunpack.c.l.b16 %v295
    %v385 = vunpack.c.h.b16 %v295
    %v386 = vunpack.c.l.b16 %v296
    %v387 = vunpack.c.h.b16 %v296
    %v388 = vunpack.c.l.b16 %v297
    %v389 = vunpack.c.h.b16 %v297
    %v390 = vunpack.c.l.b16 %v298
    %v391 = vunpack.c.h.b16 %v298
    %v392 = vunpack.c.l.b16 %v299
    %v393 = vunpack.c.h.b16 %v299
    %v394 = vunpack.c.l.b16 %v300
    %v395 = vunpack.c.h.b16 %v300
    %v396 = vunpack.c.l.b16 %v301
    %v397 = vunpack.c.h.b16 %v301
    %v398 = vpack.c.b16 %v336, %v334
    %v399 = vpack.c.b16 %v337, %v335
    %v400 = vpack.c.b16 %v340, %v338
    %v401 = vpack.c.b16 %v341, %v339
    %v402 = vpack.c.b16 %v344, %v342
    %v403 = vpack.c.b16 %v345, %v343
    %v404 = vpack.c.b16 %v348, %v346
    %v405 = vpack.c.b16 %v349, %v347
    %v406 = vpack.c.b16 %v352, %v350
    %v407 = vpack.c.b16 %v353, %v351
    %v408 = vpack.c.b16 %v356, %v354
    %v409 = vpack.c.b16 %v357, %v355
    %v410 = vpack.c.b16 %v360, %v358
    %v411 = vpack.c.b16 %v361, %v359
    %v412 = vpack.c.b16 %v364, %v362
    %v413 = vpack.c.b16 %v365, %v363
    %v414 = vpack.c.b16 %v368, %v366
    %v415 = vpack.c.b16 %v369, %v367
    %v416 = vpack.c.b16 %v372, %v370
    %v417 = vpack.c.b16 %v373, %v371
    %v418 = vpack.c.b16 %v376, %v374
    %v419 = vpack.c.b16 %v377, %v375
    %v420 = vpack.c.b16 %v380, %v378
    %v421 = vpack.c.b16 %v381, %v379
    %v422 = vpack.c.b16 %v384, %v382
    %v423 = vpack.c.b16 %v385, %v383
    %v424 = vpack.c.b16 %v388, %v386
    %v425 = vpack.c.b16 %v389, %v387
    %v426 = vpack.c.b16 %v392, %v390
    %v427 = vpack.c.b16 %v393, %v391
    %v428 = vpack.c.b16 %v396, %v394
    %v429 = vpack.c.b16 %v397, %v395
    %462 = vmatprep.subr.bf16.mxu0 %v399
    %463 = vmatpush1.bf16.msra.mxu0 %v398
    %464 = vmatprep.subr.bf16.mxu0 %v401
    %465 = vmatpush1.bf16.msra.mxu0 %v400
    %466 = vmatprep.subr.bf16.mxu0 %v403
    %467 = vmatpush1.bf16.msra.mxu0 %v402
    %468 = vmatprep.subr.bf16.mxu0 %v405
    %469 = vmatpush1.bf16.msra.mxu0 %v404
    %470 = vmatprep.subr.bf16.mxu0 %v407
    %471 = vmatpush1.bf16.msra.mxu0 %v406
    %472 = vmatprep.subr.bf16.mxu0 %v409
    %473 = vmatpush1.bf16.msra.mxu0 %v408
    %474 = vmatprep.subr.bf16.mxu0 %v411
    %475 = vmatpush1.bf16.msra.mxu0 %v410
    %476 = vmatprep.subr.bf16.mxu0 %v413
    %477 = vmatpush1.bf16.msra.mxu0 %v412
    %478 = vmatprep.subr.bf16.mxu0 %v415
    %479 = vmatpush1.bf16.msra.mxu0 %v414
    %480 = vmatprep.subr.bf16.mxu0 %v417
    %481 = vmatpush1.bf16.msra.mxu0 %v416
    %482 = vmatprep.subr.bf16.mxu0 %v419
    %483 = vmatpush1.bf16.msra.mxu0 %v418
    %484 = vmatprep.subr.bf16.mxu0 %v421
    %485 = vmatpush1.bf16.msra.mxu0 %v420
    %486 = vmatprep.subr.bf16.mxu0 %v423
    %487 = vmatpush1.bf16.msra.mxu0 %v422
    %488 = vmatprep.subr.bf16.mxu0 %v425
    %489 = vmatpush1.bf16.msra.mxu0 %v424
    %490 = vmatprep.subr.bf16.mxu0 %v427
    %491 = vmatpush1.bf16.msra.mxu0 %v426
    %492 = vmatprep.subr.bf16.mxu0 %v429
    %493 = vmatpush1.bf16.msra.mxu0 %v428
    %494 = vmatprep.mubr.bf16.mxu0 %v267
    %495 = vmatmul.mubr.bf16.gmra.mrb[0].mxu0 %v266
    %v496 = vpop.f32.mrb[0].mxu0
    %v497 = vadd.f32 0.0, %v496
    %v498 = vpop.f32.mrb[0].mxu0
    %v499 = vadd.f32 0.0, %v498
    %v500 = vpop.f32.mrb[0].mxu0
    %v501 = vadd.f32 0.0, %v500
    %v502 = vpop.f32.mrb[0].mxu0
    %v503 = vadd.f32 0.0, %v502
    %504 = vmatprep.mubr.bf16.mxu0 %v269
    %505 = vmatmul.mubr.bf16.gmra.mrb[0].mxu0 %v268
    %v506 = vpop.f32.mrb[0].mxu0
    %v507 = vadd.f32 0.0, %v506
    %v508 = vpop.f32.mrb[0].mxu0
    %v509 = vadd.f32 0.0, %v508
    %v510 = vpop.f32.mrb[0].mxu0
    %v511 = vadd.f32 0.0, %v510
    %v512 = vpop.f32.mrb[0].mxu0
    %v513 = vadd.f32 0.0, %v512
    %514 = vdwg.mxu0
    %v515 = vld [vmem:[%s5] sm:$0x1]
    %v517 = vlaneseq
    %v518 = vshrl.u32 %v517, 7
    %v519 = vsub.s32 0, %v518
    %v520 = vrot.slane %v515, %v519
    %v522 = vadd.f32 %v497, %v520
    %v523 = vadd.f32 %v501, %v520
    %v524 = vadd.f32 %v507, %v520
    %v525 = vadd.f32 %v511, %v520
    %v526 = vmax.f32 %v522, 0.0
    %v527 = vmax.f32 %v523, 0.0
    %v528 = vmax.f32 %v524, 0.0
    %v529 = vmax.f32 %v525, 0.0
    %v530 = vpack.c.bf16 %v527, %v526
    %v531 = vpack.c.bf16 %v529, %v528
    %v532 = vld [vmem:[#allocation8] sm:$0xf]
    %v533 = vld [vmem:[#allocation8 + $0x4] sm:$0xf]
    %v534 = vld [vmem:[#allocation8 + $0x8] sm:$0xf]
    %v535 = vld [vmem:[#allocation8 + $0xc] sm:$0xf]
    %v536 = vld [vmem:[#allocation8 + $0x10] sm:$0xf]
    %v537 = vld [vmem:[#allocation8 + $0x14] sm:$0xf]
    %v538 = vld [vmem:[#allocation8 + $0x18] sm:$0xf]
    %v539 = vld [vmem:[#allocation8 + $0x1c] sm:$0xf]
    %v540 = vld [vmem:[#allocation8 + $0x20] sm:$0xf]
    %v541 = vld [vmem:[#allocation8 + $0x24] sm:$0xf]
    %v542 = vld [vmem:[#allocation8 + $0x28] sm:$0xf]
    %v543 = vld [vmem:[#allocation8 + $0x2c] sm:$0xf]
    %v544 = vld [vmem:[#allocation8 + $0x30] sm:$0xf]
    %v545 = vld [vmem:[#allocation8 + $0x34] sm:$0xf]
    %v546 = vld [vmem:[#allocation8 + $0x38] sm:$0xf]
    %v547 = vld [vmem:[#allocation8 + $0x3c] sm:$0xf]
    %v548 = vld [vmem:[#allocation10] sm:$0x1]
    %v550 = vlaneseq
    %v551 = vshrl.u32 %v550, 7
    %v552 = vsub.s32 0, %v551
    %v553 = vrot.slane %v548, %v552
    %v571 = vunpack.c.l.b16 %v532
    %v572 = vunpack.c.l.b16 %v533
    %v573 = vunpack.c.l.b16 %v534
    %v574 = vunpack.c.l.b16 %v535
    %v575 = vunpack.c.l.b16 %v536
    %v576 = vunpack.c.l.b16 %v537
    %v577 = vunpack.c.l.b16 %v538
    %v578 = vunpack.c.l.b16 %v539
    %v579 = vunpack.c.l.b16 %v540
    %v580 = vunpack.c.l.b16 %v541
    %v581 = vunpack.c.l.b16 %v542
    %v582 = vunpack.c.l.b16 %v543
    %v583 = vunpack.c.l.b16 %v544
    %v584 = vunpack.c.l.b16 %v545
    %v585 = vunpack.c.l.b16 %v546
    %v586 = vunpack.c.l.b16 %v547
    %v587 = vpack.c.b16 %v572, %v571
    %v588 = vpack.c.b16 %v574, %v573
    %v589 = vpack.c.b16 %v576, %v575
    %v590 = vpack.c.b16 %v578, %v577
    %v591 = vpack.c.b16 %v580, %v579
    %v592 = vpack.c.b16 %v582, %v581
    %v593 = vpack.c.b16 %v584, %v583
    %v594 = vpack.c.b16 %v586, %v585
    %603 = vmatprep.subr.bf16.mxu0 0
    %604 = vmatpush1.bf16.msra.mxu0 %v587
    %605 = vmatprep.subr.bf16.mxu0 0
    %606 = vmatpush1.bf16.msra.mxu0 %v588
    %607 = vmatprep.subr.bf16.mxu0 0
    %608 = vmatpush1.bf16.msra.mxu0 %v589
    %609 = vmatprep.subr.bf16.mxu0 0
    %610 = vmatpush1.bf16.msra.mxu0 %v590
    %611 = vmatprep.subr.bf16.mxu0 0
    %612 = vmatpush1.bf16.msra.mxu0 %v591
    %613 = vmatprep.subr.bf16.mxu0 0
    %614 = vmatpush1.bf16.msra.mxu0 %v592
    %615 = vmatprep.subr.bf16.mxu0 0
    %616 = vmatpush1.bf16.msra.mxu0 %v593
    %617 = vmatprep.subr.bf16.mxu0 0
    %618 = vmatpush1.bf16.msra.mxu0 %v594
    %619 = vmatprep.subr.bf16.mxu0 0
    %620 = vmatpush1.bf16.msra.mxu0 0
    %621 = vmatprep.subr.bf16.mxu0 0
    %622 = vmatpush1.bf16.msra.mxu0 0
    %623 = vmatprep.subr.bf16.mxu0 0
    %624 = vmatpush1.bf16.msra.mxu0 0
    %625 = vmatprep.subr.bf16.mxu0 0
    %626 = vmatpush1.bf16.msra.mxu0 0
    %627 = vmatprep.subr.bf16.mxu0 0
    %628 = vmatpush1.bf16.msra.mxu0 0
    %629 = vmatprep.subr.bf16.mxu0 0
    %630 = vmatpush1.bf16.msra.mxu0 0
    %631 = vmatprep.subr.bf16.mxu0 0
    %632 = vmatpush1.bf16.msra.mxu0 0
    %633 = vmatprep.subr.bf16.mxu0 0
    %634 = vmatpush1.bf16.msra.mxu0 0
    %635 = vmatprep.mubr.bf16.mxu0 0
    %636 = vmatmul.mubr.bf16.gmra.mrb[0].mxu0 %v530
    %v637 = vpop.f32.mrb[0].mxu0
    %v638 = vadd.f32 %v553, %v637
    %v639 = vpop.f32.mrb[0].mxu0
    %v640 = vpop.f32.mrb[0].mxu0
    %v641 = vadd.f32 %v553, %v640
    %v642 = vpop.f32.mrb[0].mxu0
    %643 = vmatprep.mubr.bf16.mxu0 0
    %644 = vmatmul.mubr.bf16.gmra.mrb[0].mxu0 %v531
    %v645 = vpop.f32.mrb[0].mxu0
    %v646 = vadd.f32 %v553, %v645
    %v647 = vpop.f32.mrb[0].mxu0
    %v648 = vpop.f32.mrb[0].mxu0
    %v649 = vadd.f32 %v553, %v648
    %v650 = vpop.f32.mrb[0].mxu0
    %651 = vdwg.mxu0
    %v652 = vmax.f32 %v638, 0.0
    %v653 = vmax.f32 %v641, 0.0
    %v654 = vmax.f32 %v646, 0.0
    %v655 = vmax.f32 %v649, 0.0
    %v656 = vadd.f32 %v652, %v499
    %v657 = vadd.f32 %v653, %v503
    %v658 = vadd.f32 %v654, %v509
    %v659 = vadd.f32 %v655, %v513
    %v660 = vpack.c.bf16 %v657, %v656
    %v661 = vpack.c.bf16 %v659, %v658
    %v662 = vld [vmem:[%s8] sm:$0xff]
    %v663 = vld [vmem:[%s8 + $0x8] sm:$0xf]
    %v664 = vld [vmem:[%s8 + $0xc] sm:$0xff]
    %v665 = vld [vmem:[%s8 + $0x14] sm:$0xf]
    %v666 = vld [vmem:[%s8 + $0x18] sm:$0xff]
    %v667 = vld [vmem:[%s8 + $0x20] sm:$0xf]
    %v668 = vld [vmem:[%s8 + $0x24] sm:$0xff]
    %v669 = vld [vmem:[%s8 + $0x2c] sm:$0xf]
    %v670 = vld [vmem:[%s8 + $0x30] sm:$0xff]
    %v671 = vld [vmem:[%s8 + $0x38] sm:$0xf]
    %v672 = vld [vmem:[%s8 + $0x3c] sm:$0xff]
    %v673 = vld [vmem:[%s8 + $0x44] sm:$0xf]
    %v674 = vld [vmem:[%s8 + $0x48] sm:$0xff]
    %v675 = vld [vmem:[%s8 + $0x50] sm:$0xf]
    %v676 = vld [vmem:[%s8 + $0x54] sm:$0xff]
    %v677 = vld [vmem:[%s8 + $0x5c] sm:$0xf]
    %v678 = vld [vmem:[%s8 + $0x60] sm:$0xff]
    %v679 = vld [vmem:[%s8 + $0x68] sm:$0xf]
    %v680 = vld [vmem:[%s8 + $0x6c] sm:$0xff]
    %v681 = vld [vmem:[%s8 + $0x74] sm:$0xf]
    %v682 = vld [vmem:[%s8 + $0x78] sm:$0xff]
    %v683 = vld [vmem:[%s8 + $0x80] sm:$0xf]
    %v684 = vld [vmem:[%s8 + $0x84] sm:$0xff]
    %v685 = vld [vmem:[%s8 + $0x8c] sm:$0xf]
    %v686 = vld [vmem:[%s8 + $0x90] sm:$0xff]
    %v687 = vld [vmem:[%s8 + $0x98] sm:$0xf]
    %v688 = vld [vmem:[%s8 + $0x9c] sm:$0xff]
    %v689 = vld [vmem:[%s8 + $0xa4] sm:$0xf]
    %v690 = vld [vmem:[%s8 + $0xa8] sm:$0xff]
    %v691 = vld [vmem:[%s8 + $0xb0] sm:$0xf]
    %v692 = vld [vmem:[%s8 + $0xb4] sm:$0xff]
    %v693 = vld [vmem:[%s8 + $0xbc] sm:$0xf]
    %v694 = vpack.c.bf16 %v219, %v218
    %v695 = vpack.c.bf16 %v221, %v220
    %v696 = vld [vmem:[%s9] sm:$0xff]
    %v697 = vld [vmem:[%s9 + $0x8] sm:$0xf]
    %v698 = vld [vmem:[%s9 + $0xc] sm:$0xff]
    %v699 = vld [vmem:[%s9 + $0x14] sm:$0xf]
    %v700 = vld [vmem:[%s9 + $0x18] sm:$0xff]
    %v701 = vld [vmem:[%s9 + $0x20] sm:$0xf]
    %v702 = vld [vmem:[%s9 + $0x24] sm:$0xff]
    %v703 = vld [vmem:[%s9 + $0x2c] sm:$0xf]
    %v704 = vld [vmem:[%s9 + $0x30] sm:$0xff]
    %v705 = vld [vmem:[%s9 + $0x38] sm:$0xf]
    %v706 = vld [vmem:[%s9 + $0x3c] sm:$0xff]
    %v707 = vld [vmem:[%s9 + $0x44] sm:$0xf]
    %v708 = vld [vmem:[%s9 + $0x48] sm:$0xff]
    %v709 = vld [vmem:[%s9 + $0x50] sm:$0xf]
    %v710 = vld [vmem:[%s9 + $0x54] sm:$0xff]
    %v711 = vld [vmem:[%s9 + $0x5c] sm:$0xf]
    %v728 = vunpack.c.l.b16 %v696
    %v729 = vunpack.c.h.b16 %v696
    %v730 = vunpack.c.l.b16 %v697
    %v731 = vunpack.c.l.b16 %v698
    %v732 = vunpack.c.h.b16 %v698
    %v733 = vunpack.c.l.b16 %v699
    %v734 = vunpack.c.l.b16 %v700
    %v735 = vunpack.c.h.b16 %v700
    %v736 = vunpack.c.l.b16 %v701
    %v737 = vunpack.c.l.b16 %v702
    %v738 = vunpack.c.h.b16 %v702
    %v739 = vunpack.c.l.b16 %v703
    %v740 = vunpack.c.l.b16 %v704
    %v741 = vunpack.c.h.b16 %v704
    %v742 = vunpack.c.l.b16 %v705
    %v743 = vunpack.c.l.b16 %v706
    %v744 = vunpack.c.h.b16 %v706
    %v745 = vunpack.c.l.b16 %v707
    %v746 = vunpack.c.l.b16 %v708
    %v747 = vunpack.c.h.b16 %v708
    %v748 = vunpack.c.l.b16 %v709
    %v749 = vunpack.c.l.b16 %v710
    %v750 = vunpack.c.h.b16 %v710
    %v751 = vunpack.c.l.b16 %v711
    %v752 = vpack.c.b16 %v731, %v728
    %v753 = vpack.c.b16 %v732, %v729
    %v754 = vpack.c.b16 %v733, %v730
    %v755 = vpack.c.b16 %v737, %v734
    %v756 = vpack.c.b16 %v738, %v735
    %v757 = vpack.c.b16 %v739, %v736
    %v758 = vpack.c.b16 %v743, %v740
    %v759 = vpack.c.b16 %v744, %v741
    %v760 = vpack.c.b16 %v745, %v742
    %v761 = vpack.c.b16 %v749, %v746
    %v762 = vpack.c.b16 %v750, %v747
    %v763 = vpack.c.b16 %v751, %v748
    %vm776 = vcmask 523264
    %v778 = vsel %vm776, %v694, 0
    %v781 = vsel %vm776, %v695, 0
    %783 = vmatprep.subr.bf16.mxu0 %v753
    %784 = vmatpush1.bf16.msra.mxu0 %v752
    %785 = vmatprep.subr.bf16.mxu0 %v756
    %786 = vmatpush1.bf16.msra.mxu0 %v755
    %787 = vmatprep.subr.bf16.mxu0 %v759
    %788 = vmatpush1.bf16.msra.mxu0 %v758
    %789 = vmatprep.subr.bf16.mxu0 %v762
    %790 = vmatpush1.bf16.msra.mxu0 %v761
    %791 = vmatprep.subr.bf16.mxu0 0
    %792 = vmatpush1.bf16.msra.mxu0 0
    %793 = vmatprep.subr.bf16.mxu0 0
    %794 = vmatpush1.bf16.msra.mxu0 0
    %795 = vmatprep.subr.bf16.mxu0 0
    %796 = vmatpush1.bf16.msra.mxu0 0
    %797 = vmatprep.subr.bf16.mxu0 0
    %798 = vmatpush1.bf16.msra.mxu0 0
    %799 = vmatprep.subr.bf16.mxu0 0
    %800 = vmatpush1.bf16.msra.mxu0 0
    %801 = vmatprep.subr.bf16.mxu0 0
    %802 = vmatpush1.bf16.msra.mxu0 0
    %803 = vmatprep.subr.bf16.mxu0 0
    %804 = vmatpush1.bf16.msra.mxu0 0
    %805 = vmatprep.subr.bf16.mxu0 0
    %806 = vmatpush1.bf16.msra.mxu0 0
    %807 = vmatprep.subr.bf16.mxu0 0
    %808 = vmatpush1.bf16.msra.mxu0 0
    %809 = vmatprep.subr.bf16.mxu0 0
    %810 = vmatpush1.bf16.msra.mxu0 0
    %811 = vmatprep.subr.bf16.mxu0 0
    %812 = vmatpush1.bf16.msra.mxu0 0
    %813 = vmatprep.subr.bf16.mxu0 0
    %814 = vmatpush1.bf16.msra.mxu0 0
    %815 = vmatprep.mubr.bf16.mxu0 0
    %816 = vmatmul.mubr.bf16.gmra.mrb[0].mxu0 %v778
    %v817 = vpop.f32.mrb[0].mxu0
    %v818 = vadd.f32 0.0, %v817
    %v819 = vpop.f32.mrb[0].mxu0
    %v820 = vadd.f32 0.0, %v819
    %v821 = vpop.f32.mrb[0].mxu0
    %v822 = vadd.f32 0.0, %v821
    %v823 = vpop.f32.mrb[0].mxu0
    %v824 = vadd.f32 0.0, %v823
    %825 = vmatprep.mubr.bf16.mxu0 0
    %826 = vmatmul.mubr.bf16.gmra.mrb[0].mxu0 %v781
    %v827 = vpop.f32.mrb[0].mxu0
    %v828 = vadd.f32 0.0, %v827
    %v829 = vpop.f32.mrb[0].mxu0
    %v830 = vadd.f32 0.0, %v829
    %v831 = vpop.f32.mrb[0].mxu0
    %v832 = vadd.f32 0.0, %v831
    %v833 = vpop.f32.mrb[0].mxu0
    %v834 = vadd.f32 0.0, %v833
    %835 = vdwg.mxu0
    %836 = vmatprep.subr.bf16.mxu0 0
    %837 = vmatpush1.bf16.msra.mxu0 %v754
    %838 = vmatprep.subr.bf16.mxu0 0
    %839 = vmatpush1.bf16.msra.mxu0 %v757
    %840 = vmatprep.subr.bf16.mxu0 0
    %841 = vmatpush1.bf16.msra.mxu0 %v760
    %842 = vmatprep.subr.bf16.mxu0 0
    %843 = vmatpush1.bf16.msra.mxu0 %v763
    %844 = vmatprep.subr.bf16.mxu0 0
    %845 = vmatpush1.bf16.msra.mxu0 0
    %846 = vmatprep.subr.bf16.mxu0 0
    %847 = vmatpush1.bf16.msra.mxu0 0
    %848 = vmatprep.subr.bf16.mxu0 0
    %849 = vmatpush1.bf16.msra.mxu0 0
    %850 = vmatprep.subr.bf16.mxu0 0
    %851 = vmatpush1.bf16.msra.mxu0 0
    %852 = vmatprep.subr.bf16.mxu0 0
    %853 = vmatpush1.bf16.msra.mxu0 0
    %854 = vmatprep.subr.bf16.mxu0 0
    %855 = vmatpush1.bf16.msra.mxu0 0
    %856 = vmatprep.subr.bf16.mxu0 0
    %857 = vmatpush1.bf16.msra.mxu0 0
    %858 = vmatprep.subr.bf16.mxu0 0
    %859 = vmatpush1.bf16.msra.mxu0 0
    %860 = vmatprep.subr.bf16.mxu0 0
    %861 = vmatpush1.bf16.msra.mxu0 0
    %862 = vmatprep.subr.bf16.mxu0 0
    %863 = vmatpush1.bf16.msra.mxu0 0
    %864 = vmatprep.subr.bf16.mxu0 0
    %865 = vmatpush1.bf16.msra.mxu0 0
    %866 = vmatprep.subr.bf16.mxu0 0
    %867 = vmatpush1.bf16.msra.mxu0 0
    %868 = vmatprep.mubr.bf16.mxu0 0
    %869 = vmatmul.mubr.bf16.gmra.mrb[0].mxu0 %v778
    %v870 = vpop.f32.mrb[0].mxu0
    %v871 = vadd.f32 0.0, %v870
    %v872 = vpop.f32.mrb[0].mxu0
    %v873 = vpop.f32.mrb[0].mxu0
    %v874 = vadd.f32 0.0, %v873
    %v875 = vpop.f32.mrb[0].mxu0
    %876 = vmatprep.mubr.bf16.mxu0 0
    %877 = vmatmul.mubr.bf16.gmra.mrb[0].mxu0 %v781
    %v878 = vpop.f32.mrb[0].mxu0
    %v879 = vadd.f32 0.0, %v878
    %v880 = vpop.f32.mrb[0].mxu0
    %v881 = vpop.f32.mrb[0].mxu0
    %v882 = vadd.f32 0.0, %v881
    %v883 = vpop.f32.mrb[0].mxu0
    %884 = vdwg.mxu0
    %v917 = vunpack.c.l.b16 %v662
    %v918 = vunpack.c.h.b16 %v662
    %v919 = vunpack.c.l.b16 %v663
    %v920 = vunpack.c.l.b16 %v664
    %v921 = vunpack.c.h.b16 %v664
    %v922 = vunpack.c.l.b16 %v665
    %v923 = vunpack.c.l.b16 %v666
    %v924 = vunpack.c.h.b16 %v666
    %v925 = vunpack.c.l.b16 %v667
    %v926 = vunpack.c.l.b16 %v668
    %v927 = vunpack.c.h.b16 %v668
    %v928 = vunpack.c.l.b16 %v669
    %v929 = vunpack.c.l.b16 %v670
    %v930 = vunpack.c.h.b16 %v670
    %v931 = vunpack.c.l.b16 %v671
    %v932 = vunpack.c.l.b16 %v672
    %v933 = vunpack.c.h.b16 %v672
    %v934 = vunpack.c.l.b16 %v673
    %v935 = vunpack.c.l.b16 %v674
    %v936 = vunpack.c.h.b16 %v674
    %v937 = vunpack.c.l.b16 %v675
    %v938 = vunpack.c.l.b16 %v676
    %v939 = vunpack.c.h.b16 %v676
    %v940 = vunpack.c.l.b16 %v677
    %v941 = vunpack.c.l.b16 %v678
    %v942 = vunpack.c.h.b16 %v678
    %v943 = vunpack.c.l.b16 %v679
    %v944 = vunpack.c.l.b16 %v680
    %v945 = vunpack.c.h.b16 %v680
    %v946 = vunpack.c.l.b16 %v681
    %v947 = vunpack.c.l.b16 %v682
    %v948 = vunpack.c.h.b16 %v682
    %v949 = vunpack.c.l.b16 %v683
    %v950 = vunpack.c.l.b16 %v684
    %v951 = vunpack.c.h.b16 %v684
    %v952 = vunpack.c.l.b16 %v685
    %v953 = vunpack.c.l.b16 %v686
    %v954 = vunpack.c.h.b16 %v686
    %v955 = vunpack.c.l.b16 %v687
    %v956 = vunpack.c.l.b16 %v688
    %v957 = vunpack.c.h.b16 %v688
    %v958 = vunpack.c.l.b16 %v689
    %v959 = vunpack.c.l.b16 %v690
    %v960 = vunpack.c.h.b16 %v690
    %v961 = vunpack.c.l.b16 %v691
    %v962 = vunpack.c.l.b16 %v692
    %v963 = vunpack.c.h.b16 %v692
    %v964 = vunpack.c.l.b16 %v693
    %v965 = vpack.c.b16 %v920, %v917
    %v966 = vpack.c.b16 %v921, %v918
    %v967 = vpack.c.b16 %v922, %v919
    %v968 = vpack.c.b16 %v926, %v923
    %v969 = vpack.c.b16 %v927, %v924
    %v970 = vpack.c.b16 %v928, %v925
    %v971 = vpack.c.b16 %v932, %v929
    %v972 = vpack.c.b16 %v933, %v930
    %v973 = vpack.c.b16 %v934, %v931
    %v974 = vpack.c.b16 %v938, %v935
    %v975 = vpack.c.b16 %v939, %v936
    %v976 = vpack.c.b16 %v940, %v937
    %v977 = vpack.c.b16 %v944, %v941
    %v978 = vpack.c.b16 %v945, %v942
    %v979 = vpack.c.b16 %v946, %v943
    %v980 = vpack.c.b16 %v950, %v947
    %v981 = vpack.c.b16 %v951, %v948
    %v982 = vpack.c.b16 %v952, %v949
    %v983 = vpack.c.b16 %v956, %v953
    %v984 = vpack.c.b16 %v957, %v954
    %v985 = vpack.c.b16 %v958, %v955
    %v986 = vpack.c.b16 %v962, %v959
    %v987 = vpack.c.b16 %v963, %v960
    %v988 = vpack.c.b16 %v964, %v961
    %1013 = vmatprep.subr.bf16.mxu0 %v966
    %1014 = vmatpush1.bf16.msra.mxu0 %v965
    %1015 = vmatprep.subr.bf16.mxu0 %v969
    %1016 = vmatpush1.bf16.msra.mxu0 %v968
    %1017 = vmatprep.subr.bf16.mxu0 %v972
    %1018 = vmatpush1.bf16.msra.mxu0 %v971
    %1019 = vmatprep.subr.bf16.mxu0 %v975
    %1020 = vmatpush1.bf16.msra.mxu0 %v974
    %1021 = vmatprep.subr.bf16.mxu0 %v978
    %1022 = vmatpush1.bf16.msra.mxu0 %v977
    %1023 = vmatprep.subr.bf16.mxu0 %v981
    %1024 = vmatpush1.bf16.msra.mxu0 %v980
    %1025 = vmatprep.subr.bf16.mxu0 %v984
    %1026 = vmatpush1.bf16.msra.mxu0 %v983
    %1027 = vmatprep.subr.bf16.mxu0 %v987
    %1028 = vmatpush1.bf16.msra.mxu0 %v986
    %1029 = vmatprep.subr.bf16.mxu0 0
    %1030 = vmatpush1.bf16.msra.mxu0 0
    %1031 = vmatprep.subr.bf16.mxu0 0
    %1032 = vmatpush1.bf16.msra.mxu0 0
    %1033 = vmatprep.subr.bf16.mxu0 0
    %1034 = vmatpush1.bf16.msra.mxu0 0
    %1035 = vmatprep.subr.bf16.mxu0 0
    %1036 = vmatpush1.bf16.msra.mxu0 0
    %1037 = vmatprep.subr.bf16.mxu0 0
    %1038 = vmatpush1.bf16.msra.mxu0 0
    %1039 = vmatprep.subr.bf16.mxu0 0
    %1040 = vmatpush1.bf16.msra.mxu0 0
    %1041 = vmatprep.subr.bf16.mxu0 0
    %1042 = vmatpush1.bf16.msra.mxu0 0
    %1043 = vmatprep.subr.bf16.mxu0 0
    %1044 = vmatpush1.bf16.msra.mxu0 0
    %1045 = vmatprep.mubr.bf16.mxu0 0
    %1046 = vmatmul.mubr.bf16.gmra.mrb[0].mxu0 %v660
    %v1047 = vpop.f32.mrb[0].mxu0
    %v1048 = vadd.f32 %v818, %v1047
    %v1049 = vpop.f32.mrb[0].mxu0
    %v1050 = vadd.f32 %v820, %v1049
    %v1051 = vpop.f32.mrb[0].mxu0
    %v1052 = vadd.f32 %v822, %v1051
    %v1053 = vpop.f32.mrb[0].mxu0
    %v1054 = vadd.f32 %v824, %v1053
    %1055 = vmatprep.mubr.bf16.mxu0 0
    %1056 = vmatmul.mubr.bf16.gmra.mrb[0].mxu0 %v661
    %v1057 = vpop.f32.mrb[0].mxu0
    %v1058 = vadd.f32 %v828, %v1057
    %v1059 = vpop.f32.mrb[0].mxu0
    %v1060 = vadd.f32 %v830, %v1059
    %v1061 = vpop.f32.mrb[0].mxu0
    %v1062 = vadd.f32 %v832, %v1061
    %v1063 = vpop.f32.mrb[0].mxu0
    %v1064 = vadd.f32 %v834, %v1063
    %1065 = vdwg.mxu0
    %1066 = vmatprep.subr.bf16.mxu0 0
    %1067 = vmatpush1.bf16.msra.mxu0 %v967
    %1068 = vmatprep.subr.bf16.mxu0 0
    %1069 = vmatpush1.bf16.msra.mxu0 %v970
    %1070 = vmatprep.subr.bf16.mxu0 0
    %1071 = vmatpush1.bf16.msra.mxu0 %v973
    %1072 = vmatprep.subr.bf16.mxu0 0
    %1073 = vmatpush1.bf16.msra.mxu0 %v976
    %1074 = vmatprep.subr.bf16.mxu0 0
    %1075 = vmatpush1.bf16.msra.mxu0 %v979
    %1076 = vmatprep.subr.bf16.mxu0 0
    %1077 = vmatpush1.bf16.msra.mxu0 %v982
    %1078 = vmatprep.subr.bf16.mxu0 0
    %1079 = vmatpush1.bf16.msra.mxu0 %v985
    %1080 = vmatprep.subr.bf16.mxu0 0
    %1081 = vmatpush1.bf16.msra.mxu0 %v988
    %1082 = vmatprep.subr.bf16.mxu0 0
    %1083 = vmatpush1.bf16.msra.mxu0 0
    %1084 = vmatprep.subr.bf16.mxu0 0
    %1085 = vmatpush1.bf16.msra.mxu0 0
    %1086 = vmatprep.subr.bf16.mxu0 0
    %1087 = vmatpush1.bf16.msra.mxu0 0
    %1088 = vmatprep.subr.bf16.mxu0 0
    %1089 = vmatpush1.bf16.msra.mxu0 0
    %1090 = vmatprep.subr.bf16.mxu0 0
    %1091 = vmatpush1.bf16.msra.mxu0 0
    %1092 = vmatprep.subr.bf16.mxu0 0
    %1093 = vmatpush1.bf16.msra.mxu0 0
    %1094 = vmatprep.subr.bf16.mxu0 0
    %1095 = vmatpush1.bf16.msra.mxu0 0
    %1096 = vmatprep.subr.bf16.mxu0 0
    %1097 = vmatpush1.bf16.msra.mxu0 0
    %1098 = vmatprep.mubr.bf16.mxu0 0
    %1099 = vmatmul.mubr.bf16.gmra.mrb[0].mxu0 %v660
    %v1100 = vpop.f32.mrb[0].mxu0
    %v1101 = vadd.f32 %v871, %v1100
    %v1102 = vpop.f32.mrb[0].mxu0
    %v1103 = vpop.f32.mrb[0].mxu0
    %v1104 = vadd.f32 %v874, %v1103
    %v1105 = vpop.f32.mrb[0].mxu0
    %1106 = vmatprep.mubr.bf16.mxu0 0
    %1107 = vmatmul.mubr.bf16.gmra.mrb[0].mxu0 %v661
    %v1108 = vpop.f32.mrb[0].mxu0
    %v1109 = vadd.f32 %v879, %v1108
    %v1110 = vpop.f32.mrb[0].mxu0
    %v1111 = vpop.f32.mrb[0].mxu0
    %v1112 = vadd.f32 %v882, %v1111
    %v1113 = vpop.f32.mrb[0].mxu0
    %1114 = vdwg.mxu0
    %v1115 = vld [vmem:[#allocation11] sm:$0x3]
    %v1117 = vlaneseq
    %v1118 = vshrl.u32 %v1117, 7
    %v1119 = vsub.s32 0, %v1118
    %v1120 = vrot.slane %v1115, %v1119
    %v1121 = vlaneseq
    %v1122 = vshrl.u32 %v1121, 7
    %v1123 = vsub.s32 1, %v1122
    %v1124 = vrot.slane %v1115, %v1123
    %v1127 = vadd.f32 %v1048, %v1120
    %v1128 = vadd.f32 %v1050, %v1124
    %v1129 = vadd.f32 %v1052, %v1120
    %v1130 = vadd.f32 %v1054, %v1124
    %v1131 = vadd.f32 %v1058, %v1120
    %v1132 = vadd.f32 %v1060, %v1124
    %v1133 = vadd.f32 %v1062, %v1120
    %v1134 = vadd.f32 %v1064, %v1124
    %v1135 = vxor.u32 %v1127, 2147483648
    %v1136 = vxor.u32 %v1129, 2147483648
    %v1137 = vxor.u32 %v1131, 2147483648
    %v1138 = vxor.u32 %v1133, 2147483648
    %v1139 = vmul.f32 %v1135, 1.442695
    %v1140 = vpow.pop %v1139
    %v1141 = vmul.f32 %v1136, 1.442695
    %v1142 = vpow.pop %v1141
    %v1143 = vmul.f32 %v1137, 1.442695
    %v1144 = vpow.pop %v1143
    %v1145 = vmul.f32 %v1138, 1.442695
    %v1146 = vpow.pop %v1145
    %v1147 = vadd.f32 %v1140, 1.0
    %v1148 = vadd.f32 %v1142, 1.0
    %v1149 = vadd.f32 %v1144, 1.0
    %v1150 = vadd.f32 %v1146, 1.0
    %v1151 = vrcp.pop %v1147
    %v1152 = vmul.f32 1.0, %v1151
    %v1153 = vrcp.pop %v1148
    %v1154 = vmul.f32 1.0, %v1153
    %v1155 = vrcp.pop %v1149
    %v1156 = vmul.f32 1.0, %v1155
    %v1157 = vrcp.pop %v1150
    %v1158 = vmul.f32 1.0, %v1157
    %v1159 = vtanh.pop %v1128
    %v1160 = vtanh.pop %v1130
    %v1161 = vtanh.pop %v1132
    %v1162 = vtanh.pop %v1134
    %v1163 = vmul.f32 %v1152, %v1159
    %v1164 = vmul.f32 %v1154, %v1160
    %v1165 = vmul.f32 %v1156, %v1161
    %v1166 = vmul.f32 %v1158, %v1162
    %v1167 = vld [vmem:[#allocation13] sm:$0x1]
    %v1169 = vlaneseq
    %v1170 = vshrl.u32 %v1169, 7
    %v1171 = vsub.s32 0, %v1170
    %v1172 = vrot.slane %v1167, %v1171
    %v1174 = vadd.f32 %v1101, %v1172
    %v1175 = vadd.f32 %v1104, %v1172
    %v1176 = vadd.f32 %v1109, %v1172
    %v1177 = vadd.f32 %v1112, %v1172
    %v1178 = vld [vmem:[#allocation7] sm:$0xff]
    %vm1179 = vcmask 261120
    %v1181 = vsel %vm1179, %v1178, 0
    %1183 = vmatprep.subr.mxu0 0.0
    %1184 = vmatpush1.msra.mxu0 %v1163
    %1185 = vmatprep.subr.mxu0 0.0
    %1186 = vmatpush1.msra.mxu0 %v1164
    %1187 = vmatprep.subr.mxu0 0.0
    %1188 = vmatpush1.msra.mxu0 %v1165
    %1189 = vmatprep.subr.mxu0 0.0
    %1190 = vmatpush1.msra.mxu0 %v1166
    %1191 = vmatprep.subr.mxu0 0.0
    %1192 = vmatpush1.msra.mxu0 0.0
    %1193 = vmatprep.subr.mxu0 0.0
    %1194 = vmatpush1.msra.mxu0 0.0
    %1195 = vmatprep.subr.mxu0 0.0
    %1196 = vmatpush1.msra.mxu0 0.0
    %1197 = vmatprep.subr.mxu0 0.0
    %1198 = vmatpush1.msra.mxu0 0.0
    %1199 = vmatprep.subr.mxu0 0.0
    %1200 = vmatpush1.msra.mxu0 0.0
    %1201 = vmatprep.subr.mxu0 0.0
    %1202 = vmatpush1.msra.mxu0 0.0
    %1203 = vmatprep.subr.mxu0 0.0
    %1204 = vmatpush1.msra.mxu0 0.0
    %1205 = vmatprep.subr.mxu0 0.0
    %1206 = vmatpush1.msra.mxu0 0.0
    %1207 = vmatprep.subr.mxu0 0.0
    %1208 = vmatpush1.msra.mxu0 0.0
    %1209 = vmatprep.subr.mxu0 0.0
    %1210 = vmatpush1.msra.mxu0 0.0
    %1211 = vmatprep.subr.mxu0 0.0
    %1212 = vmatpush1.msra.mxu0 0.0
    %1213 = vmatprep.subr.mxu0 0.0
    %1214 = vmatpush1.msra.mxu0 0.0
    %1215 = vmatprep.subr.mxu0 0.0
    %1216 = vmatpush1.msra.mxu0 0.0
    %1217 = vmatprep.subr.mxu0 0.0
    %1218 = vmatpush1.msra.mxu0 0.0
    %1219 = vmatprep.subr.mxu0 0.0
    %1220 = vmatpush1.msra.mxu0 0.0
    %1221 = vmatprep.subr.mxu0 0.0
    %1222 = vmatpush1.msra.mxu0 0.0
    %1223 = vmatprep.subr.mxu0 0.0
    %1224 = vmatpush1.msra.mxu0 0.0
    %1225 = vmatprep.subr.mxu0 0.0
    %1226 = vmatpush1.msra.mxu0 0.0
    %1227 = vmatprep.subr.mxu0 0.0
    %1228 = vmatpush1.msra.mxu0 0.0
    %1229 = vmatprep.subr.mxu0 0.0
    %1230 = vmatpush1.msra.mxu0 0.0
    %1231 = vmatprep.subr.mxu0 0.0
    %1232 = vmatpush1.msra.mxu0 0.0
    %1233 = vmatprep.subr.mxu0 0.0
    %1234 = vmatpush1.msra.mxu0 0.0
    %1235 = vmatprep.subr.mxu0 0.0
    %1236 = vmatpush1.msra.mxu0 0.0
    %1237 = vmatprep.subr.mxu0 0.0
    %1238 = vmatpush1.msra.mxu0 0.0
    %1239 = vmatprep.subr.mxu0 0.0
    %1240 = vmatpush1.msra.mxu0 0.0
    %1241 = vmatprep.subr.mxu0 0.0
    %1242 = vmatpush1.msra.mxu0 0.0
    %1243 = vmatprep.subr.mxu0 0.0
    %1244 = vmatpush1.msra.mxu0 0.0
    %1245 = vmatprep.subr.mxu0 0.0
    %1246 = vmatpush1.msra.mxu0 0.0
    %1247 = vmatprep.mubr.f32.mxu0 0.0
    %1248 = vmatmul.mubr.f32.gmra.mrb[0].mxu0 %v1181
    %v1249 = vpop.f32.mrb[0].mxu0
    %v1250 = vadd.f32 0.0, %v1249
    %v1251 = vpop.f32.mrb[0].mxu0
    %1252 = vdwg.mxu0
    %v1253 = vtanh.pop %v1250
    %v1254 = vpack.c.bf16 %v1253, %v1253
    %v1255 = vld [vmem:[%s12] sm:$0xf]
    %v1256 = vld [vmem:[%s12 + $0x4] sm:$0xf]
    %v1257 = vld [vmem:[%s12 + $0x8] sm:$0xf]
    %v1258 = vld [vmem:[%s12 + $0xc] sm:$0xf]
    %v1259 = vld [vmem:[%s12 + $0x10] sm:$0xf]
    %v1260 = vld [vmem:[%s12 + $0x14] sm:$0xf]
    %v1261 = vld [vmem:[%s12 + $0x18] sm:$0xf]
    %v1262 = vld [vmem:[%s12 + $0x1c] sm:$0xf]
    %v1263 = vld [vmem:[%s12 + $0x20] sm:$0xf]
    %v1264 = vld [vmem:[%s12 + $0x24] sm:$0xf]
    %v1265 = vld [vmem:[%s12 + $0x28] sm:$0xf]
    %v1266 = vld [vmem:[%s12 + $0x2c] sm:$0xf]
    %v1267 = vld [vmem:[%s12 + $0x30] sm:$0xf]
    %v1268 = vld [vmem:[%s12 + $0x34] sm:$0xf]
    %v1269 = vld [vmem:[%s12 + $0x38] sm:$0xf]
    %v1270 = vld [vmem:[%s12 + $0x3c] sm:$0xf]
    %v1287 = vunpack.c.l.b16 %v1255
    %v1288 = vunpack.c.l.b16 %v1256
    %v1289 = vunpack.c.l.b16 %v1257
    %v1290 = vunpack.c.l.b16 %v1258
    %v1291 = vunpack.c.l.b16 %v1259
    %v1292 = vunpack.c.l.b16 %v1260
    %v1293 = vunpack.c.l.b16 %v1261
    %v1294 = vunpack.c.l.b16 %v1262
    %v1295 = vunpack.c.l.b16 %v1263
    %v1296 = vunpack.c.l.b16 %v1264
    %v1297 = vunpack.c.l.b16 %v1265
    %v1298 = vunpack.c.l.b16 %v1266
    %v1299 = vunpack.c.l.b16 %v1267
    %v1300 = vunpack.c.l.b16 %v1268
    %v1301 = vunpack.c.l.b16 %v1269
    %v1302 = vunpack.c.l.b16 %v1270
    %v1303 = vpack.c.b16 %v1288, %v1287
    %v1304 = vpack.c.b16 %v1290, %v1289
    %v1305 = vpack.c.b16 %v1292, %v1291
    %v1306 = vpack.c.b16 %v1294, %v1293
    %v1307 = vpack.c.b16 %v1296, %v1295
    %v1308 = vpack.c.b16 %v1298, %v1297
    %v1309 = vpack.c.b16 %v1300, %v1299
    %v1310 = vpack.c.b16 %v1302, %v1301
    %1319 = vmatprep.subr.bf16.mxu0 0
    %1320 = vmatpush1.bf16.msra.mxu0 %v1303
    %1321 = vmatprep.subr.bf16.mxu0 0
    %1322 = vmatpush1.bf16.msra.mxu0 %v1304
    %1323 = vmatprep.subr.bf16.mxu0 0
    %1324 = vmatpush1.bf16.msra.mxu0 %v1305
    %1325 = vmatprep.subr.bf16.mxu0 0
    %1326 = vmatpush1.bf16.msra.mxu0 %v1306
    %1327 = vmatprep.subr.bf16.mxu0 0
    %1328 = vmatpush1.bf16.msra.mxu0 %v1307
    %1329 = vmatprep.subr.bf16.mxu0 0
    %1330 = vmatpush1.bf16.msra.mxu0 %v1308
    %1331 = vmatprep.subr.bf16.mxu0 0
    %1332 = vmatpush1.bf16.msra.mxu0 %v1309
    %1333 = vmatprep.subr.bf16.mxu0 0
    %1334 = vmatpush1.bf16.msra.mxu0 %v1310
    %1335 = vmatprep.subr.bf16.mxu0 0
    %1336 = vmatpush1.bf16.msra.mxu0 0
    %1337 = vmatprep.subr.bf16.mxu0 0
    %1338 = vmatpush1.bf16.msra.mxu0 0
    %1339 = vmatprep.subr.bf16.mxu0 0
    %1340 = vmatpush1.bf16.msra.mxu0 0
    %1341 = vmatprep.subr.bf16.mxu0 0
    %1342 = vmatpush1.bf16.msra.mxu0 0
    %1343 = vmatprep.subr.bf16.mxu0 0
    %1344 = vmatpush1.bf16.msra.mxu0 0
    %1345 = vmatprep.subr.bf16.mxu0 0
    %1346 = vmatpush1.bf16.msra.mxu0 0
    %1347 = vmatprep.subr.bf16.mxu0 0
    %1348 = vmatpush1.bf16.msra.mxu0 0
    %1349 = vmatprep.subr.bf16.mxu0 0
    %1350 = vmatpush1.bf16.msra.mxu0 0
    %1351 = vmatprep.mubr.bf16.mxu0 0
    %1352 = vmatmul.mubr.bf16.gmra.mrb[0].mxu0 %v1254
    %v1353 = vpop.f32.mrb[0].mxu0
    %v1354 = vadd.f32 0.0, %v1353
    %v1355 = vpop.f32.mrb[0].mxu0
    %v1356 = vpop.f32.mrb[0].mxu0
    %v1357 = vpop.f32.mrb[0].mxu0
    %1358 = vdwg.mxu0
    %v1359 = vld [vmem:[#allocation14] sm:$0x1]
    %v1361 = vlaneseq
    %v1362 = vshrl.u32 %v1361, 7
    %v1363 = vsub.s32 0, %v1362
    %v1364 = vrot.slane %v1359, %v1363
    %1365 = vrot.lane.b32.xlu0 %v1364, 32
    %v1366 = vpop.permute.xlu0 %1365
    %v1368 = vadd.f32 %v1354, %v1366
    %1370 = vrot.lane.b32.xlu0 %v1368, 96
    %v1371 = vpop.permute.xlu0 %1370
    %1373 = vst.msk [vmem:[#allocation23] sm:$0xff] %vm776, %v1371
    %v1374 = vpack.c.bf16 %v1368, %v1368
    %v1375 = vld [vmem:[#allocation17] sm:$0xf]
    %v1376 = vld [vmem:[#allocation17 + $0x4] sm:$0xf]
    %v1377 = vld [vmem:[#allocation17 + $0x8] sm:$0xf]
    %v1378 = vld [vmem:[#allocation17 + $0xc] sm:$0xf]
    %1380 = vrot.lane.b32.xlu0 %v1374, 96
    %v1381 = vpop.permute.xlu0 %1380
    %v1386 = vunpack.c.l.b16 %v1375
    %v1387 = vunpack.c.l.b16 %v1376
    %v1388 = vunpack.c.l.b16 %v1377
    %v1389 = vunpack.c.l.b16 %v1378
    %v1390 = vpack.c.b16 %v1387, %v1386
    %v1391 = vpack.c.b16 %v1389, %v1388
    %v1395 = vsel %vm1179, %v1381, 0
    %1397 = vmatprep.subr.bf16.mxu0 0
    %1398 = vmatpush1.bf16.msra.mxu0 %v1390
    %1399 = vmatprep.subr.bf16.mxu0 0
    %1400 = vmatpush1.bf16.msra.mxu0 %v1391
    %1401 = vmatprep.subr.bf16.mxu0 0
    %1402 = vmatpush1.bf16.msra.mxu0 0
    %1403 = vmatprep.subr.bf16.mxu0 0
    %1404 = vmatpush1.bf16.msra.mxu0 0
    %1405 = vmatprep.subr.bf16.mxu0 0
    %1406 = vmatpush1.bf16.msra.mxu0 0
    %1407 = vmatprep.subr.bf16.mxu0 0
    %1408 = vmatpush1.bf16.msra.mxu0 0
    %1409 = vmatprep.subr.bf16.mxu0 0
    %1410 = vmatpush1.bf16.msra.mxu0 0
    %1411 = vmatprep.subr.bf16.mxu0 0
    %1412 = vmatpush1.bf16.msra.mxu0 0
    %1413 = vmatprep.subr.bf16.mxu0 0
    %1414 = vmatpush1.bf16.msra.mxu0 0
    %1415 = vmatprep.subr.bf16.mxu0 0
    %1416 = vmatpush1.bf16.msra.mxu0 0
    %1417 = vmatprep.subr.bf16.mxu0 0
    %1418 = vmatpush1.bf16.msra.mxu0 0
    %1419 = vmatprep.subr.bf16.mxu0 0
    %1420 = vmatpush1.bf16.msra.mxu0 0
    %1421 = vmatprep.subr.bf16.mxu0 0
    %1422 = vmatpush1.bf16.msra.mxu0 0
    %1423 = vmatprep.subr.bf16.mxu0 0
    %1424 = vmatpush1.bf16.msra.mxu0 0
    %1425 = vmatprep.subr.bf16.mxu0 0
    %1426 = vmatpush1.bf16.msra.mxu0 0
    %1427 = vmatprep.subr.bf16.mxu0 0
    %1428 = vmatpush1.bf16.msra.mxu0 0
    %1429 = vmatprep.mubr.bf16.mxu0 0
    %1430 = vmatmul.mubr.bf16.gmra.mrb[0].mxu0 %v1395
    %v1431 = vpop.f32.mrb[0].mxu0
    %v1432 = vadd.f32 0.0, %v1431
    %v1433 = vpop.f32.mrb[0].mxu0
    %v1434 = vpop.f32.mrb[0].mxu0
    %v1435 = vpop.f32.mrb[0].mxu0
    %1436 = vdwg.mxu0
    %v1437 = vld [vmem:[%s3] sm:$0xff]
    %v1438 = vld [vmem:[%s3 + $0x8] sm:$0xff]
    %v1439 = vld [vmem:[%s3 + $0x10] sm:$0xff]
    %v1440 = vld [vmem:[%s3 + $0x18] sm:$0xff]
    %1442 = vrot.lane.b32.xlu0 %v1432, 32
    %v1443 = vpop.permute.xlu0 %1442
    %v1445 = vsel %vm1179, %v1354, %v1443
    %vm1446 = vcmask 64512
    %v1448 = vsel %vm1446, %v1437, 0
    %v1451 = vsel %vm1446, %v1438, 0
    %v1454 = vsel %vm1446, %v1439, 0
    %v1457 = vsel %vm1446, %v1440, 0
    %1459 = vmatprep.subr.mxu0 0.0
    %1460 = vmatpush1.msra.mxu0 %v1445
    %1461 = vmatprep.subr.mxu0 0.0
    %1462 = vmatpush1.msra.mxu0 0.0
    %1463 = vmatprep.subr.mxu0 0.0
    %1464 = vmatpush1.msra.mxu0 0.0
    %1465 = vmatprep.subr.mxu0 0.0
    %1466 = vmatpush1.msra.mxu0 0.0
    %1467 = vmatprep.subr.mxu0 0.0
    %1468 = vmatpush1.msra.mxu0 0.0
    %1469 = vmatprep.subr.mxu0 0.0
    %1470 = vmatpush1.msra.mxu0 0.0
    %1471 = vmatprep.subr.mxu0 0.0
    %1472 = vmatpush1.msra.mxu0 0.0
    %1473 = vmatprep.subr.mxu0 0.0
    %1474 = vmatpush1.msra.mxu0 0.0
    %1475 = vmatprep.subr.mxu0 0.0
    %1476 = vmatpush1.msra.mxu0 0.0
    %1477 = vmatprep.subr.mxu0 0.0
    %1478 = vmatpush1.msra.mxu0 0.0
    %1479 = vmatprep.subr.mxu0 0.0
    %1480 = vmatpush1.msra.mxu0 0.0
    %1481 = vmatprep.subr.mxu0 0.0
    %1482 = vmatpush1.msra.mxu0 0.0
    %1483 = vmatprep.subr.mxu0 0.0
    %1484 = vmatpush1.msra.mxu0 0.0
    %1485 = vmatprep.subr.mxu0 0.0
    %1486 = vmatpush1.msra.mxu0 0.0
    %1487 = vmatprep.subr.mxu0 0.0
    %1488 = vmatpush1.msra.mxu0 0.0
    %1489 = vmatprep.subr.mxu0 0.0
    %1490 = vmatpush1.msra.mxu0 0.0
    %1491 = vmatprep.subr.mxu0 0.0
    %1492 = vmatpush1.msra.mxu0 0.0
    %1493 = vmatprep.subr.mxu0 0.0
    %1494 = vmatpush1.msra.mxu0 0.0
    %1495 = vmatprep.subr.mxu0 0.0
    %1496 = vmatpush1.msra.mxu0 0.0
    %1497 = vmatprep.subr.mxu0 0.0
    %1498 = vmatpush1.msra.mxu0 0.0
    %1499 = vmatprep.subr.mxu0 0.0
    %1500 = vmatpush1.msra.mxu0 0.0
    %1501 = vmatprep.subr.mxu0 0.0
    %1502 = vmatpush1.msra.mxu0 0.0
    %1503 = vmatprep.subr.mxu0 0.0
    %1504 = vmatpush1.msra.mxu0 0.0
    %1505 = vmatprep.subr.mxu0 0.0
    %1506 = vmatpush1.msra.mxu0 0.0
    %1507 = vmatprep.subr.mxu0 0.0
    %1508 = vmatpush1.msra.mxu0 0.0
    %1509 = vmatprep.subr.mxu0 0.0
    %1510 = vmatpush1.msra.mxu0 0.0
    %1511 = vmatprep.subr.mxu0 0.0
    %1512 = vmatpush1.msra.mxu0 0.0
    %1513 = vmatprep.subr.mxu0 0.0
    %1514 = vmatpush1.msra.mxu0 0.0
    %1515 = vmatprep.subr.mxu0 0.0
    %1516 = vmatpush1.msra.mxu0 0.0
    %1517 = vmatprep.subr.mxu0 0.0
    %1518 = vmatpush1.msra.mxu0 0.0
    %1519 = vmatprep.subr.mxu0 0.0
    %1520 = vmatpush1.msra.mxu0 0.0
    %1521 = vmatprep.subr.mxu0 0.0
    %1522 = vmatpush1.msra.mxu0 0.0
    %1523 = vmatprep.mubr.f32.mxu0 0.0
    %1524 = vmatmul.mubr.f32.gmra.mrb[0].mxu0 %v1448
    %v1525 = vpop.f32.mrb[0].mxu0
    %v1526 = vadd.f32 0.0, %v1525
    %v1527 = vpop.f32.mrb[0].mxu0
    %1528 = vmatprep.mubr.f32.mxu0 0.0
    %1529 = vmatmul.mubr.f32.gmra.mrb[0].mxu0 %v1451
    %v1530 = vpop.f32.mrb[0].mxu0
    %v1531 = vadd.f32 0.0, %v1530
    %v1532 = vpop.f32.mrb[0].mxu0
    %1533 = vmatprep.mubr.f32.mxu0 0.0
    %1534 = vmatmul.mubr.f32.gmra.mrb[0].mxu0 %v1454
    %v1535 = vpop.f32.mrb[0].mxu0
    %v1536 = vadd.f32 0.0, %v1535
    %v1537 = vpop.f32.mrb[0].mxu0
    %1538 = vmatprep.mubr.f32.mxu0 0.0
    %1539 = vmatmul.mubr.f32.gmra.mrb[0].mxu0 %v1457
    %v1540 = vpop.f32.mrb[0].mxu0
    %v1541 = vadd.f32 0.0, %v1540
    %v1542 = vpop.f32.mrb[0].mxu0
    %1543 = vdwg.mxu0
    %v1544 = vadd.f32 %v1174, %v1526
    %v1545 = vadd.f32 %v1175, %v1531
    %v1546 = vadd.f32 %v1176, %v1536
    %v1547 = vadd.f32 %v1177, %v1541
    %v1548 = vpack.c.bf16 %v1545, %v1544
    %v1549 = vpack.c.bf16 %v1547, %v1546
    %v1550 = vld [vmem:[#allocation16] sm:$0xf]
    %v1551 = vld [vmem:[#allocation16 + $0x4] sm:$0xf]
    %v1552 = vld [vmem:[#allocation16 + $0x8] sm:$0xf]
    %v1553 = vld [vmem:[#allocation16 + $0xc] sm:$0xf]
    %v1558 = vunpack.c.l.b16 %v1550
    %v1559 = vunpack.c.l.b16 %v1551
    %v1560 = vunpack.c.l.b16 %v1552
    %v1561 = vunpack.c.l.b16 %v1553
    %v1562 = vpack.c.b16 %v1559, %v1558
    %v1563 = vpack.c.b16 %v1561, %v1560
    %1570 = vrot.lane.b32.xlu0 %v1526, 96
    %v1571 = vpop.permute.xlu0 %1570
    %1572 = vrot.lane.b32.xlu0 %v1531, 96
    %v1573 = vpop.permute.xlu0 %1572
    %1574 = vrot.lane.b32.xlu0 %v1536, 96
    %v1575 = vpop.permute.xlu0 %1574
    %1576 = vrot.lane.b32.xlu0 %v1541, 96
    %v1577 = vpop.permute.xlu0 %1576
    %v1583 = vsel %vm1179, %v1548, 0
    %v1586 = vsel %vm1179, %v1549, 0
    %1588 = vmatprep.subr.bf16.mxu0 0
    %1589 = vmatpush1.bf16.msra.mxu0 %v1562
    %1590 = vmatprep.subr.bf16.mxu0 0
    %1591 = vmatpush1.bf16.msra.mxu0 %v1563
    %1592 = vmatprep.subr.bf16.mxu0 0
    %1593 = vmatpush1.bf16.msra.mxu0 0
    %1594 = vmatprep.subr.bf16.mxu0 0
    %1595 = vmatpush1.bf16.msra.mxu0 0
    %1596 = vmatprep.subr.bf16.mxu0 0
    %1597 = vmatpush1.bf16.msra.mxu0 0
    %1598 = vmatprep.subr.bf16.mxu0 0
    %1599 = vmatpush1.bf16.msra.mxu0 0
    %1600 = vmatprep.subr.bf16.mxu0 0
    %1601 = vmatpush1.bf16.msra.mxu0 0
    %1602 = vmatprep.subr.bf16.mxu0 0
    %1603 = vmatpush1.bf16.msra.mxu0 0
    %1604 = vmatprep.subr.bf16.mxu0 0
    %1605 = vmatpush1.bf16.msra.mxu0 0
    %1606 = vmatprep.subr.bf16.mxu0 0
    %1607 = vmatpush1.bf16.msra.mxu0 0
    %1608 = vmatprep.subr.bf16.mxu0 0
    %1609 = vmatpush1.bf16.msra.mxu0 0
    %1610 = vmatprep.subr.bf16.mxu0 0
    %1611 = vmatpush1.bf16.msra.mxu0 0
    %1612 = vmatprep.subr.bf16.mxu0 0
    %1613 = vmatpush1.bf16.msra.mxu0 0
    %1614 = vmatprep.subr.bf16.mxu0 0
    %1615 = vmatpush1.bf16.msra.mxu0 0
    %1616 = vmatprep.subr.bf16.mxu0 0
    %1617 = vmatpush1.bf16.msra.mxu0 0
    %1618 = vmatprep.subr.bf16.mxu0 0
    %1619 = vmatpush1.bf16.msra.mxu0 0
    %1620 = vmatprep.mubr.bf16.mxu0 0
    %1621 = vmatmul.mubr.bf16.gmra.mrb[0].mxu0 %v1583
    %v1622 = vpop.f32.mrb[0].mxu0
    %v1623 = vadd.f32 %v1571, %v1622
    %v1624 = vpop.f32.mrb[0].mxu0
    %v1625 = vpop.f32.mrb[0].mxu0
    %v1626 = vadd.f32 %v1573, %v1625
    %v1627 = vpop.f32.mrb[0].mxu0
    %1628 = vmatprep.mubr.bf16.mxu0 0
    %1629 = vmatmul.mubr.bf16.gmra.mrb[0].mxu0 %v1586
    %v1630 = vpop.f32.mrb[0].mxu0
    %v1631 = vadd.f32 %v1575, %v1630
    %v1632 = vpop.f32.mrb[0].mxu0
    %v1633 = vpop.f32.mrb[0].mxu0
    %v1634 = vadd.f32 %v1577, %v1633
    %v1635 = vpop.f32.mrb[0].mxu0
    %1636 = vdwg.mxu0
    %v1637 = vld [vmem:[%s16] sm:$0x1]
    %v1639 = vlaneseq
    %v1640 = vshrl.u32 %v1639, 7
    %v1641 = vsub.s32 0, %v1640
    %v1642 = vrot.slane %v1637, %v1641
    %v1644 = vadd.f32 %v1623, %v1642
    %v1645 = vadd.f32 %v1626, %v1642
    %v1646 = vadd.f32 %v1631, %v1642
    %v1647 = vadd.f32 %v1634, %v1642
    %v1648 = vtanh.pop %v1644
    %v1649 = vtanh.pop %v1645
    %v1650 = vtanh.pop %v1646
    %v1651 = vtanh.pop %v1647
    %v1652 = vpack.c.bf16 %v1649, %v1648
    %v1653 = vpack.c.bf16 %v1651, %v1650
    %v1654 = vld [vmem:[#allocation19] sm:$0xf]
    %v1655 = vld [vmem:[#allocation19 + $0x4] sm:$0xf]
    %v1656 = vld [vmem:[#allocation19 + $0x8] sm:$0xf]
    %v1657 = vld [vmem:[#allocation19 + $0xc] sm:$0xf]
    %v1658 = vld [vmem:[%s18] sm:$0x1]
    %v1660 = vlaneseq
    %v1661 = vshrl.u32 %v1660, 7
    %v1662 = vsub.s32 0, %v1661
    %v1663 = vrot.slane %v1658, %v1662
    %v1669 = vunpack.c.l.b16 %v1654
    %v1670 = vunpack.c.l.b16 %v1655
    %v1671 = vunpack.c.l.b16 %v1656
    %v1672 = vunpack.c.l.b16 %v1657
    %v1673 = vpack.c.b16 %v1670, %v1669
    %v1674 = vpack.c.b16 %v1672, %v1671
    %v1678 = vsel %vm1179, %v1652, 0
    %v1681 = vsel %vm1179, %v1653, 0
    %1683 = vmatprep.subr.bf16.mxu0 0
    %1684 = vmatpush1.bf16.msra.mxu0 %v1673
    %1685 = vmatprep.subr.bf16.mxu0 0
    %1686 = vmatpush1.bf16.msra.mxu0 %v1674
    %1687 = vmatprep.subr.bf16.mxu0 0
    %1688 = vmatpush1.bf16.msra.mxu0 0
    %1689 = vmatprep.subr.bf16.mxu0 0
    %1690 = vmatpush1.bf16.msra.mxu0 0
    %1691 = vmatprep.subr.bf16.mxu0 0
    %1692 = vmatpush1.bf16.msra.mxu0 0
    %1693 = vmatprep.subr.bf16.mxu0 0
    %1694 = vmatpush1.bf16.msra.mxu0 0
    %1695 = vmatprep.subr.bf16.mxu0 0
    %1696 = vmatpush1.bf16.msra.mxu0 0
    %1697 = vmatprep.subr.bf16.mxu0 0
    %1698 = vmatpush1.bf16.msra.mxu0 0
    %1699 = vmatprep.subr.bf16.mxu0 0
    %1700 = vmatpush1.bf16.msra.mxu0 0
    %1701 = vmatprep.subr.bf16.mxu0 0
    %1702 = vmatpush1.bf16.msra.mxu0 0
    %1703 = vmatprep.subr.bf16.mxu0 0
    %1704 = vmatpush1.bf16.msra.mxu0 0
    %1705 = vmatprep.subr.bf16.mxu0 0
    %1706 = vmatpush1.bf16.msra.mxu0 0
    %1707 = vmatprep.subr.bf16.mxu0 0
    %1708 = vmatpush1.bf16.msra.mxu0 0
    %1709 = vmatprep.subr.bf16.mxu0 0
    %1710 = vmatpush1.bf16.msra.mxu0 0
    %1711 = vmatprep.subr.bf16.mxu0 0
    %1712 = vmatpush1.bf16.msra.mxu0 0
    %1713 = vmatprep.subr.bf16.mxu0 0
    %1714 = vmatpush1.bf16.msra.mxu0 0
    %1715 = vmatprep.mubr.bf16.mxu0 0
    %1716 = vmatmul.mubr.bf16.gmra.mrb[0].mxu0 %v1678
    %v1717 = vpop.f32.mrb[0].mxu0
    %v1718 = vadd.f32 %v1663, %v1717
    %v1719 = vpop.f32.mrb[0].mxu0
    %v1720 = vpop.f32.mrb[0].mxu0
    %v1721 = vadd.f32 %v1663, %v1720
    %v1722 = vpop.f32.mrb[0].mxu0
    %1723 = vmatprep.mubr.bf16.mxu0 0
    %1724 = vmatmul.mubr.bf16.gmra.mrb[0].mxu0 %v1681
    %v1725 = vpop.f32.mrb[0].mxu0
    %v1726 = vadd.f32 %v1663, %v1725
    %v1727 = vpop.f32.mrb[0].mxu0
    %v1728 = vpop.f32.mrb[0].mxu0
    %v1729 = vadd.f32 %v1663, %v1728
    %v1730 = vpop.f32.mrb[0].mxu0
    %1731 = vdwg.mxu0
    %v1732 = vtanh.pop %v1718
    %v1733 = vtanh.pop %v1721
    %v1734 = vtanh.pop %v1726
    %v1735 = vtanh.pop %v1729
    %v1736 = vpack.c.bf16 %v1733, %v1732
    %v1737 = vpack.c.bf16 %v1735, %v1734
    %s1738 = scalar_lea.vmem [#allocation19], 16
    %v1739 = vld [vmem:[%s1738] sm:$0xf]
    %v1740 = vld [vmem:[%s1738 + $0x4] sm:$0xf]
    %v1741 = vld [vmem:[%s1738 + $0x8] sm:$0xf]
    %v1742 = vld [vmem:[%s1738 + $0xc] sm:$0xf]
    %s1743 = scalar_lea.vmem %s18, 1
    %v1744 = vld [vmem:[%s1743] sm:$0x1]
    %v1746 = vlaneseq
    %v1747 = vshrl.u32 %v1746, 7
    %v1748 = vsub.s32 0, %v1747
    %v1749 = vrot.slane %v1744, %v1748
    %v1755 = vunpack.c.l.b16 %v1739
    %v1756 = vunpack.c.l.b16 %v1740
    %v1757 = vunpack.c.l.b16 %v1741
    %v1758 = vunpack.c.l.b16 %v1742
    %v1759 = vpack.c.b16 %v1756, %v1755
    %v1760 = vpack.c.b16 %v1758, %v1757
    %v1764 = vsel %vm1179, %v1736, 0
    %v1767 = vsel %vm1179, %v1737, 0
    %1769 = vmatprep.subr.bf16.mxu0 0
    %1770 = vmatpush1.bf16.msra.mxu0 %v1759
    %1771 = vmatprep.subr.bf16.mxu0 0
    %1772 = vmatpush1.bf16.msra.mxu0 %v1760
    %1773 = vmatprep.subr.bf16.mxu0 0
    %1774 = vmatpush1.bf16.msra.mxu0 0
    %1775 = vmatprep.subr.bf16.mxu0 0
    %1776 = vmatpush1.bf16.msra.mxu0 0
    %1777 = vmatprep.subr.bf16.mxu0 0
    %1778 = vmatpush1.bf16.msra.mxu0 0
    %1779 = vmatprep.subr.bf16.mxu0 0
    %1780 = vmatpush1.bf16.msra.mxu0 0
    %1781 = vmatprep.subr.bf16.mxu0 0
    %1782 = vmatpush1.bf16.msra.mxu0 0
    %1783 = vmatprep.subr.bf16.mxu0 0
    %1784 = vmatpush1.bf16.msra.mxu0 0
    %1785 = vmatprep.subr.bf16.mxu0 0
    %1786 = vmatpush1.bf16.msra.mxu0 0
    %1787 = vmatprep.subr.bf16.mxu0 0
    %1788 = vmatpush1.bf16.msra.mxu0 0
    %1789 = vmatprep.subr.bf16.mxu0 0
    %1790 = vmatpush1.bf16.msra.mxu0 0
    %1791 = vmatprep.subr.bf16.mxu0 0
    %1792 = vmatpush1.bf16.msra.mxu0 0
    %1793 = vmatprep.subr.bf16.mxu0 0
    %1794 = vmatpush1.bf16.msra.mxu0 0
    %1795 = vmatprep.subr.bf16.mxu0 0
    %1796 = vmatpush1.bf16.msra.mxu0 0
    %1797 = vmatprep.subr.bf16.mxu0 0
    %1798 = vmatpush1.bf16.msra.mxu0 0
    %1799 = vmatprep.subr.bf16.mxu0 0
    %1800 = vmatpush1.bf16.msra.mxu0 0
    %1801 = vmatprep.mubr.bf16.mxu0 0
    %1802 = vmatmul.mubr.bf16.gmra.mrb[0].mxu0 %v1764
    %v1803 = vpop.f32.mrb[0].mxu0
    %v1804 = vadd.f32 %v1749, %v1803
    %v1805 = vpop.f32.mrb[0].mxu0
    %v1806 = vpop.f32.mrb[0].mxu0
    %v1807 = vadd.f32 %v1749, %v1806
    %v1808 = vpop.f32.mrb[0].mxu0
    %1809 = vmatprep.mubr.bf16.mxu0 0
    %1810 = vmatmul.mubr.bf16.gmra.mrb[0].mxu0 %v1767
    %v1811 = vpop.f32.mrb[0].mxu0
    %v1812 = vadd.f32 %v1749, %v1811
    %v1813 = vpop.f32.mrb[0].mxu0
    %v1814 = vpop.f32.mrb[0].mxu0
    %v1815 = vadd.f32 %v1749, %v1814
    %v1816 = vpop.f32.mrb[0].mxu0
    %1817 = vdwg.mxu0
    %v1818 = vtanh.pop %v1804
    %v1819 = vtanh.pop %v1807
    %v1820 = vtanh.pop %v1812
    %v1821 = vtanh.pop %v1815
    %v1822 = vpack.c.bf16 %v1819, %v1818
    %v1823 = vpack.c.bf16 %v1821, %v1820
    %s1824 = scalar_lea.vmem [#allocation19], 32
    %v1825 = vld [vmem:[%s1824] sm:$0xf]
    %v1826 = vld [vmem:[%s1824 + $0x4] sm:$0xf]
    %v1827 = vld [vmem:[%s1824 + $0x8] sm:$0xf]
    %v1828 = vld [vmem:[%s1824 + $0xc] sm:$0xf]
    %s1829 = scalar_lea.vmem %s18, 2
    %v1830 = vld [vmem:[%s1829] sm:$0x1]
    %v1832 = vlaneseq
    %v1833 = vshrl.u32 %v1832, 7
    %v1834 = vsub.s32 0, %v1833
    %v1835 = vrot.slane %v1830, %v1834
    %v1841 = vunpack.c.l.b16 %v1825
    %v1842 = vunpack.c.l.b16 %v1826
    %v1843 = vunpack.c.l.b16 %v1827
    %v1844 = vunpack.c.l.b16 %v1828
    %v1845 = vpack.c.b16 %v1842, %v1841
    %v1846 = vpack.c.b16 %v1844, %v1843
    %v1850 = vsel %vm1179, %v1822, 0
    %v1853 = vsel %vm1179, %v1823, 0
    %1855 = vmatprep.subr.bf16.mxu0 0
    %1856 = vmatpush1.bf16.msra.mxu0 %v1845
    %1857 = vmatprep.subr.bf16.mxu0 0
    %1858 = vmatpush1.bf16.msra.mxu0 %v1846
    %1859 = vmatprep.subr.bf16.mxu0 0
    %1860 = vmatpush1.bf16.msra.mxu0 0
    %1861 = vmatprep.subr.bf16.mxu0 0
    %1862 = vmatpush1.bf16.msra.mxu0 0
    %1863 = vmatprep.subr.bf16.mxu0 0
    %1864 = vmatpush1.bf16.msra.mxu0 0
    %1865 = vmatprep.subr.bf16.mxu0 0
    %1866 = vmatpush1.bf16.msra.mxu0 0
    %1867 = vmatprep.subr.bf16.mxu0 0
    %1868 = vmatpush1.bf16.msra.mxu0 0
    %1869 = vmatprep.subr.bf16.mxu0 0
    %1870 = vmatpush1.bf16.msra.mxu0 0
    %1871 = vmatprep.subr.bf16.mxu0 0
    %1872 = vmatpush1.bf16.msra.mxu0 0
    %1873 = vmatprep.subr.bf16.mxu0 0
    %1874 = vmatpush1.bf16.msra.mxu0 0
    %1875 = vmatprep.subr.bf16.mxu0 0
    %1876 = vmatpush1.bf16.msra.mxu0 0
    %1877 = vmatprep.subr.bf16.mxu0 0
    %1878 = vmatpush1.bf16.msra.mxu0 0
    %1879 = vmatprep.subr.bf16.mxu0 0
    %1880 = vmatpush1.bf16.msra.mxu0 0
    %1881 = vmatprep.subr.bf16.mxu0 0
    %1882 = vmatpush1.bf16.msra.mxu0 0
    %1883 = vmatprep.subr.bf16.mxu0 0
    %1884 = vmatpush1.bf16.msra.mxu0 0
    %1885 = vmatprep.subr.bf16.mxu0 0
    %1886 = vmatpush1.bf16.msra.mxu0 0
    %1887 = vmatprep.mubr.bf16.mxu0 0
    %1888 = vmatmul.mubr.bf16.gmra.mrb[0].mxu0 %v1850
    %v1889 = vpop.f32.mrb[0].mxu0
    %v1890 = vadd.f32 %v1835, %v1889
    %v1891 = vpop.f32.mrb[0].mxu0
    %v1892 = vpop.f32.mrb[0].mxu0
    %v1893 = vadd.f32 %v1835, %v1892
    %v1894 = vpop.f32.mrb[0].mxu0
    %1895 = vmatprep.mubr.bf16.mxu0 0
    %1896 = vmatmul.mubr.bf16.gmra.mrb[0].mxu0 %v1853
    %v1897 = vpop.f32.mrb[0].mxu0
    %v1898 = vadd.f32 %v1835, %v1897
    %v1899 = vpop.f32.mrb[0].mxu0
    %v1900 = vpop.f32.mrb[0].mxu0
    %v1901 = vadd.f32 %v1835, %v1900
    %v1902 = vpop.f32.mrb[0].mxu0
    %1903 = vdwg.mxu0
    %v1904 = vtanh.pop %v1890
    %v1905 = vtanh.pop %v1893
    %v1906 = vtanh.pop %v1898
    %v1907 = vtanh.pop %v1901
    %v1908 = vpack.c.bf16 %v1905, %v1904
    %v1909 = vpack.c.bf16 %v1907, %v1906
    %s1910 = scalar_lea.vmem [#allocation19], 48
    %v1911 = vld [vmem:[%s1910] sm:$0xf]
    %v1912 = vld [vmem:[%s1910 + $0x4] sm:$0xf]
    %v1913 = vld [vmem:[%s1910 + $0x8] sm:$0xf]
    %v1914 = vld [vmem:[%s1910 + $0xc] sm:$0xf]
    %s1915 = scalar_lea.vmem %s18, 3
    %v1916 = vld [vmem:[%s1915] sm:$0x1]
    %v1918 = vlaneseq
    %v1919 = vshrl.u32 %v1918, 7
    %v1920 = vsub.s32 0, %v1919
    %v1921 = vrot.slane %v1916, %v1920
    %v1927 = vunpack.c.l.b16 %v1911
    %v1928 = vunpack.c.l.b16 %v1912
    %v1929 = vunpack.c.l.b16 %v1913
    %v1930 = vunpack.c.l.b16 %v1914
    %v1931 = vpack.c.b16 %v1928, %v1927
    %v1932 = vpack.c.b16 %v1930, %v1929
    %v1936 = vsel %vm1179, %v1908, 0
    %v1939 = vsel %vm1179, %v1909, 0
    %1941 = vmatprep.subr.bf16.mxu0 0
    %1942 = vmatpush1.bf16.msra.mxu0 %v1931
    %1943 = vmatprep.subr.bf16.mxu0 0
    %1944 = vmatpush1.bf16.msra.mxu0 %v1932
    %1945 = vmatprep.subr.bf16.mxu0 0
    %1946 = vmatpush1.bf16.msra.mxu0 0
    %1947 = vmatprep.subr.bf16.mxu0 0
    %1948 = vmatpush1.bf16.msra.mxu0 0
    %1949 = vmatprep.subr.bf16.mxu0 0
    %1950 = vmatpush1.bf16.msra.mxu0 0
    %1951 = vmatprep.subr.bf16.mxu0 0
    %1952 = vmatpush1.bf16.msra.mxu0 0
    %1953 = vmatprep.subr.bf16.mxu0 0
    %1954 = vmatpush1.bf16.msra.mxu0 0
    %1955 = vmatprep.subr.bf16.mxu0 0
    %1956 = vmatpush1.bf16.msra.mxu0 0
    %1957 = vmatprep.subr.bf16.mxu0 0
    %1958 = vmatpush1.bf16.msra.mxu0 0
    %1959 = vmatprep.subr.bf16.mxu0 0
    %1960 = vmatpush1.bf16.msra.mxu0 0
    %1961 = vmatprep.subr.bf16.mxu0 0
    %1962 = vmatpush1.bf16.msra.mxu0 0
    %1963 = vmatprep.subr.bf16.mxu0 0
    %1964 = vmatpush1.bf16.msra.mxu0 0
    %1965 = vmatprep.subr.bf16.mxu0 0
    %1966 = vmatpush1.bf16.msra.mxu0 0
    %1967 = vmatprep.subr.bf16.mxu0 0
    %1968 = vmatpush1.bf16.msra.mxu0 0
    %1969 = vmatprep.subr.bf16.mxu0 0
    %1970 = vmatpush1.bf16.msra.mxu0 0
    %1971 = vmatprep.subr.bf16.mxu0 0
    %1972 = vmatpush1.bf16.msra.mxu0 0
    %1973 = vmatprep.mubr.bf16.mxu0 0
    %1974 = vmatmul.mubr.bf16.gmra.mrb[0].mxu0 %v1936
    %v1975 = vpop.f32.mrb[0].mxu0
    %v1976 = vadd.f32 %v1921, %v1975
    %v1977 = vpop.f32.mrb[0].mxu0
    %v1978 = vpop.f32.mrb[0].mxu0
    %v1979 = vadd.f32 %v1921, %v1978
    %v1980 = vpop.f32.mrb[0].mxu0
    %1981 = vmatprep.mubr.bf16.mxu0 0
    %1982 = vmatmul.mubr.bf16.gmra.mrb[0].mxu0 %v1939
    %v1983 = vpop.f32.mrb[0].mxu0
    %v1984 = vadd.f32 %v1921, %v1983
    %v1985 = vpop.f32.mrb[0].mxu0
    %v1986 = vpop.f32.mrb[0].mxu0
    %v1987 = vadd.f32 %v1921, %v1986
    %v1988 = vpop.f32.mrb[0].mxu0
    %1989 = vdwg.mxu0
    %v1990 = vtanh.pop %v1976
    %v1991 = vtanh.pop %v1979
    %v1992 = vtanh.pop %v1984
    %v1993 = vtanh.pop %v1987
    %v1994 = vadd.f32 %v1990, %v1648
    %v1995 = vadd.f32 %v1991, %v1649
    %v1996 = vadd.f32 %v1992, %v1650
    %v1997 = vadd.f32 %v1993, %v1651
    %v1998 = vpack.c.bf16 %v1995, %v1994
    %v1999 = vpack.c.bf16 %v1997, %v1996
    %v2000 = vld [vmem:[%s19] sm:$0xff]
    %v2001 = vld [vmem:[%s19 + $0x8] sm:$0xff]
    %v2002 = vld [vmem:[%s19 + $0x10] sm:$0xff]
    %v2003 = vld [vmem:[%s19 + $0x18] sm:$0xff]
    %v2008 = vunpack.c.l.b16 %v2000
    %v2009 = vunpack.c.h.b16 %v2000
    %v2010 = vunpack.c.l.b16 %v2001
    %v2011 = vunpack.c.h.b16 %v2001
    %v2012 = vunpack.c.l.b16 %v2002
    %v2013 = vunpack.c.h.b16 %v2002
    %v2014 = vunpack.c.l.b16 %v2003
    %v2015 = vunpack.c.h.b16 %v2003
    %v2016 = vpack.c.b16 %v2010, %v2008
    %v2017 = vpack.c.b16 %v2011, %v2009
    %v2018 = vpack.c.b16 %v2014, %v2012
    %v2019 = vpack.c.b16 %v2015, %v2013
    %v2025 = vsel %vm1179, %v1998, 0
    %v2028 = vsel %vm1179, %v1999, 0
    %2030 = vmatprep.subr.bf16.mxu0 %v2017
    %2031 = vmatpush1.bf16.msra.mxu0 %v2016
    %2032 = vmatprep.subr.bf16.mxu0 %v2019
    %2033 = vmatpush1.bf16.msra.mxu0 %v2018
    %2034 = vmatprep.subr.bf16.mxu0 0
    %2035 = vmatpush1.bf16.msra.mxu0 0
    %2036 = vmatprep.subr.bf16.mxu0 0
    %2037 = vmatpush1.bf16.msra.mxu0 0
    %2038 = vmatprep.subr.bf16.mxu0 0
    %2039 = vmatpush1.bf16.msra.mxu0 0
    %2040 = vmatprep.subr.bf16.mxu0 0
    %2041 = vmatpush1.bf16.msra.mxu0 0
    %2042 = vmatprep.subr.bf16.mxu0 0
    %2043 = vmatpush1.bf16.msra.mxu0 0
    %2044 = vmatprep.subr.bf16.mxu0 0
    %2045 = vmatpush1.bf16.msra.mxu0 0
    %2046 = vmatprep.subr.bf16.mxu0 0
    %2047 = vmatpush1.bf16.msra.mxu0 0
    %2048 = vmatprep.subr.bf16.mxu0 0
    %2049 = vmatpush1.bf16.msra.mxu0 0
    %2050 = vmatprep.subr.bf16.mxu0 0
    %2051 = vmatpush1.bf16.msra.mxu0 0
    %2052 = vmatprep.subr.bf16.mxu0 0
    %2053 = vmatpush1.bf16.msra.mxu0 0
    %2054 = vmatprep.subr.bf16.mxu0 0
    %2055 = vmatpush1.bf16.msra.mxu0 0
    %2056 = vmatprep.subr.bf16.mxu0 0
    %2057 = vmatpush1.bf16.msra.mxu0 0
    %2058 = vmatprep.subr.bf16.mxu0 0
    %2059 = vmatpush1.bf16.msra.mxu0 0
    %2060 = vmatprep.subr.bf16.mxu0 0
    %2061 = vmatpush1.bf16.msra.mxu0 0
    %2062 = vmatprep.mubr.bf16.mxu0 0
    %2063 = vmatmul.mubr.bf16.gmra.mrb[0].mxu0 %v2025
    %v2064 = vpop.f32.mrb[0].mxu0
    %v2065 = vadd.f32 0.0, %v2064
    %v2066 = vpop.f32.mrb[0].mxu0
    %v2067 = vadd.f32 0.0, %v2066
    %v2068 = vpop.f32.mrb[0].mxu0
    %v2069 = vadd.f32 0.0, %v2068
    %v2070 = vpop.f32.mrb[0].mxu0
    %v2071 = vadd.f32 0.0, %v2070
    %2072 = vmatprep.mubr.bf16.mxu0 0
    %2073 = vmatmul.mubr.bf16.gmra.mrb[0].mxu0 %v2028
    %v2074 = vpop.f32.mrb[0].mxu0
    %v2075 = vadd.f32 0.0, %v2074
    %v2076 = vpop.f32.mrb[0].mxu0
    %v2077 = vadd.f32 0.0, %v2076
    %v2078 = vpop.f32.mrb[0].mxu0
    %v2079 = vadd.f32 0.0, %v2078
    %v2080 = vpop.f32.mrb[0].mxu0
    %v2081 = vadd.f32 0.0, %v2080
    %2082 = vdwg.mxu0
    %v2083 = vmax.f32 %v2065, %v2067
    %2084 = vmax.xlane.f32.xlu0 %v2083
    %v2085 = vpop.xlane.xlu0 %2084
    %v2086 = vmax.f32 %v2069, %v2071
    %2087 = vmax.xlane.f32.xlu0 %v2086
    %v2088 = vpop.xlane.xlu0 %2087
    %v2089 = vmax.f32 %v2075, %v2077
    %2090 = vmax.xlane.f32.xlu0 %v2089
    %v2091 = vpop.xlane.xlu0 %2090
    %v2092 = vmax.f32 %v2079, %v2081
    %2093 = vmax.xlane.f32.xlu0 %v2092
    %v2094 = vpop.xlane.xlu0 %2093
    %v2095 = vsub.f32 %v2065, %v2085
    %v2096 = vsub.f32 %v2067, %v2085
    %v2097 = vsub.f32 %v2069, %v2088
    %v2098 = vsub.f32 %v2071, %v2088
    %v2099 = vsub.f32 %v2075, %v2091
    %v2100 = vsub.f32 %v2077, %v2091
    %v2101 = vsub.f32 %v2079, %v2094
    %v2102 = vsub.f32 %v2081, %v2094
    %v2103 = vmul.f32 %v2095, 1.442695
    %v2104 = vpow.pop %v2103
    %v2105 = vmul.f32 %v2096, 1.442695
    %v2106 = vpow.pop %v2105
    %v2107 = vmul.f32 %v2097, 1.442695
    %v2108 = vpow.pop %v2107
    %v2109 = vmul.f32 %v2098, 1.442695
    %v2110 = vpow.pop %v2109
    %v2111 = vmul.f32 %v2099, 1.442695
    %v2112 = vpow.pop %v2111
    %v2113 = vmul.f32 %v2100, 1.442695
    %v2114 = vpow.pop %v2113
    %v2115 = vmul.f32 %v2101, 1.442695
    %v2116 = vpow.pop %v2115
    %v2117 = vmul.f32 %v2102, 1.442695
    %v2118 = vpow.pop %v2117
    %v2119 = vadd.f32 %v2104, %v2106
    %2120 = vadd.xlane.f32.xlu0 %v2119
    %v2121 = vpop.xlane.xlu0 %2120
    %v2122 = vadd.f32 %v2108, %v2110
    %2123 = vadd.xlane.f32.xlu0 %v2122
    %v2124 = vpop.xlane.xlu0 %2123
    %v2125 = vadd.f32 %v2112, %v2114
    %2126 = vadd.xlane.f32.xlu0 %v2125
    %v2127 = vpop.xlane.xlu0 %2126
    %v2128 = vadd.f32 %v2116, %v2118
    %2129 = vadd.xlane.f32.xlu0 %v2128
    %v2130 = vpop.xlane.xlu0 %2129
    %v2131 = vrcp.pop %v2121
    %v2132 = vrcp.pop %v2124
    %v2133 = vrcp.pop %v2127
    %v2134 = vrcp.pop %v2130
    %v2135 = vmul.f32 %v2104, %v2131
    %v2136 = vmul.f32 %v2106, %v2131
    %v2137 = vmul.f32 %v2108, %v2132
    %v2138 = vmul.f32 %v2110, %v2132
    %v2139 = vmul.f32 %v2112, %v2133
    %v2140 = vmul.f32 %v2114, %v2133
    %v2141 = vmul.f32 %v2116, %v2134
    %v2142 = vmul.f32 %v2118, %v2134
    %2143 = vst [vmem:[#allocation21] sm:$0xff] %v2135
    %2144 = vst [vmem:[#allocation21 + $0x8] sm:$0xff] %v2136
    %2145 = vst [vmem:[#allocation21 + $0x10] sm:$0xff] %v2137
    %2146 = vst [vmem:[#allocation21 + $0x18] sm:$0xff] %v2138
    %2147 = vst [vmem:[#allocation21 + $0x20] sm:$0xff] %v2139
    %2148 = vst [vmem:[#allocation21 + $0x28] sm:$0xff] %v2140
    %2149 = vst [vmem:[#allocation21 + $0x30] sm:$0xff] %v2141
    %2150 = vst [vmem:[#allocation21 + $0x38] sm:$0xff] %v2142
    // Predicated region
    $region126: #{tpu_custom_call.1} parent=1 // pred_check
      _
    $region127: #{tpu_custom_call.1} parent=1 // pred_check_branch
      %2152 = sbr.rel (0) target = $region129
    $region128: #{tpu_custom_call.1} parent=1 // pred_region
      %s2154 = ssub.s32 1024, 1024
      %2155 = vsyncadd [#allocation4], %s2154
      %s2156 = sshll.u32 [#allocation20], 4
      %s2157 = int_to_ptr.vmem [resolvable:$true] %s2156
      %2162 = dma.vmem_to_hbm [thread:$0]  %s2157, 1024, %s20, [#allocation4], 256, 256, 16
    $region129: #{tpu_custom_call.1} parent=1 // pred_fallthru
      _
    // Predicated region
    $region130: #{tpu_custom_call.1} parent=1 // pred_check
      _
    $region131: #{tpu_custom_call.1} parent=1 // pred_check_branch
      %2164 = sbr.rel (0) target = $region133
    $region132: #{tpu_custom_call.1} parent=1 // pred_region
      %s2166 = ssub.s32 1024, 1024
      %2167 = vsyncadd [#allocation22], %s2166
      %s2168 = sshll.u32 [#allocation21], 4
      %s2169 = int_to_ptr.vmem [resolvable:$true] %s2168
      %2174 = dma.vmem_to_hbm [thread:$0]  %s2169, 1024, %s21, [#allocation22], 256, 256, 16
    $region133: #{tpu_custom_call.1} parent=1 // pred_fallthru
      _
    // Predicated region
    $region134: #{tpu_custom_call.1} parent=1 // pred_check
      _
    $region135: #{tpu_custom_call.1} parent=1 // pred_check_branch
      %2176 = sbr.rel (0) target = $region137
    $region136: #{tpu_custom_call.1} parent=1 // pred_region
      %s2178 = ssub.s32 128, 128
      %2179 = vsyncadd [#allocation22], %s2178
      %s2181 = sshll.u32 [#allocation23], 4
      %s2182 = int_to_ptr.vmem [resolvable:$true] %s2181
      %2184 = dma.vmem_to_hbm [thread:$0]  %s2182, 128, %s22, [#allocation22]
    $region137: #{tpu_custom_call.1} parent=1 // pred_fallthru
      _
    // Predicated region
    $region138: #{tpu_custom_call.1} parent=1 // pred_check
      _
    $region139: #{tpu_custom_call.1} parent=1 // pred_check_branch
      %2186 = sbr.rel (0) target = $region141
    $region140: #{tpu_custom_call.1} parent=1 // pred_region
      %2187 = dma.done [#allocation4], 1024
    $region141: #{tpu_custom_call.1} parent=1 // pred_fallthru
      _
    // Predicated region
    $region142: #{tpu_custom_call.1} parent=1 // pred_check
      _
    $region143: #{tpu_custom_call.1} parent=1 // pred_check_branch
      %2189 = sbr.rel (0) target = $region145
    $region144: #{tpu_custom_call.1} parent=1 // pred_region
      %2190 = dma.done [#allocation22], 1024
    $region145: #{tpu_custom_call.1} parent=1 // pred_fallthru
      _
    // Predicated region
    $region146: #{tpu_custom_call.1} parent=1 // pred_check
      _
    $region147: #{tpu_custom_call.1} parent=1 // pred_check_branch
      %2192 = sbr.rel (0) target = $region149
    $region148: #{tpu_custom_call.1} parent=1 // pred_region
      %2193 = dma.done [#allocation22], 128
    $region149: #{tpu_custom_call.1} parent=1 // pred_fallthru
      _
    %2194 = vsyncpa [#allocation3], 1
    %2195 = vsyncpa [#allocation6], 1
    %2196 = vsyncpa [#allocation9], 1
    %2197 = vsyncpa [#allocation12], 1
    %2198 = vsyncpa [#allocation15], 1
    %2199 = vsyncpa [#allocation18], 1
    %2200 = vsyncpa [#allocation4], 1
    %2201 = vsyncpa [#allocation22], 1

</llo_original>
